<compile_context>
chip_gen: v7x
topology: tpu7x:2x2x1
jax: 0.10.0
libtpu: 0.0.40
codegen_flags: <defaults>
</compile_context>

<pallas_src>
import jax
import jax.numpy as jnp
from jax.experimental import pallas as pl
from jax.experimental.pallas import tpu as pltpu


INPUT_DIM = 270
HIDDEN1 = 512
HIDDEN2 = 256
HIDDEN3 = 128
OUTPUT_DIM = 60

# Lane-aligned padded dims (multiples of 128).
INPUT_PAD = 384    # 3 * 128
OUTPUT_PAD = 128


def _round_up(x, m):
    return (x + m - 1) // m * m


def qnetwork_kernel(x_ref,
                    w1_ref, b1_ref,
                    w2_ref, b2_ref,
                    w3_ref, b3_ref,
                    w4_ref, b4_ref,
                    out_ref):
    # fc1 + relu  (bf16 MXU operands, f32 accumulate, f32 epilogue)
    h = jnp.dot(x_ref[...], w1_ref[...], preferred_element_type=jnp.float32)
    h = jnp.maximum(h + b1_ref[...], 0.0)
    # fc2 + relu
    h = jnp.dot(h.astype(jnp.bfloat16), w2_ref[...],
                preferred_element_type=jnp.float32)
    h = jnp.maximum(h + b2_ref[...], 0.0)
    # fc3 + relu
    h = jnp.dot(h.astype(jnp.bfloat16), w3_ref[...],
                preferred_element_type=jnp.float32)
    h = jnp.maximum(h + b3_ref[...], 0.0)
    # fc4 (no activation); 128-wide lane-dense store (padded cols sliced in wrapper)
    h = jnp.dot(h.astype(jnp.bfloat16), w4_ref[...],
                preferred_element_type=jnp.float32)
    out_ref[...] = (h + b4_ref[...]).astype(out_ref.dtype)


def qnetwork_forward(x, packed_params, *, block_b=256):
    """x: (B, INPUT_DIM) float32 -> (B, OUTPUT_DIM) float32."""
    (w1, b1), (w2, b2), (w3, b3), (w4, b4) = packed_params
    B = x.shape[0]

    # Batch tile: large for throughput, small (multiple of 8) for tiny batches.
    TB = block_b if B >= block_b else max(8, _round_up(B, 8))
    B_pad = _round_up(B, TB)
    grid = (B_pad // TB,)

    # Zero-pad batch and feature axes; cast activations to bf16 for the MXU.
    x_p = jnp.zeros((B_pad, INPUT_PAD), jnp.bfloat16)
    x_p = x_p.at[:B, :INPUT_DIM].set(x.astype(jnp.bfloat16))

    w_elems = (INPUT_PAD * HIDDEN1 + HIDDEN1 * HIDDEN2
               + HIDDEN2 * HIDDEN3 + HIDDEN3 * OUTPUT_PAD)
    flops = 2 * B_pad * w_elems
    bytes_accessed = (2 * w_elems                                   # bf16 weights
                      + 4 * (HIDDEN1 + HIDDEN2 + HIDDEN3 + OUTPUT_PAD)  # f32 biases
                      + B_pad * INPUT_PAD * 2                       # bf16 x
                      + B_pad * OUTPUT_PAD * 4)                     # f32 out

    resident = lambda i: (0, 0)   # weights/biases: same block every step -> stay in VMEM

    out_p = pl.pallas_call(
        qnetwork_kernel,
        out_shape=jax.ShapeDtypeStruct((B_pad, OUTPUT_PAD), jnp.float32),
        grid=grid,
        in_specs=[
            pl.BlockSpec((TB, INPUT_PAD), lambda i: (i, 0)),   # x tile (pipelined)
            pl.BlockSpec((INPUT_PAD, HIDDEN1), resident),
            pl.BlockSpec((1, HIDDEN1), resident),
            pl.BlockSpec((HIDDEN1, HIDDEN2), resident),
            pl.BlockSpec((1, HIDDEN2), resident),
            pl.BlockSpec((HIDDEN2, HIDDEN3), resident),
            pl.BlockSpec((1, HIDDEN3), resident),
            pl.BlockSpec((HIDDEN3, OUTPUT_PAD), resident),
            pl.BlockSpec((1, OUTPUT_PAD), resident),
        ],
        out_specs=pl.BlockSpec((TB, OUTPUT_PAD), lambda i: (i, 0)),
        compiler_params=pltpu.CompilerParams(
            dimension_semantics=("parallel",)),
        cost_estimate=pl.CostEstimate(
            flops=flops, transcendentals=0, bytes_accessed=bytes_accessed),
    )(x_p, w1, b1, w2, b2, w3, b3, w4, b4)

    return out_p[:B, :OUTPUT_DIM]


def init_params(key):
    """Deterministic init mirroring nn.Linear's uniform(-1/sqrt(fan_in), +)."""
    dims = [(INPUT_DIM, HIDDEN1), (HIDDEN1, HIDDEN2),
            (HIDDEN2, HIDDEN3), (HIDDEN3, OUTPUT_DIM)]
    params = []
    for fan_in, fan_out in dims:
        key, kw, kb = jax.random.split(key, 3)
        bound = 1.0 / jnp.sqrt(jnp.float32(fan_in))
        w = jax.random.uniform(kw, (fan_in, fan_out), jnp.float32,
                               minval=-bound, maxval=bound)
        b = jax.random.uniform(kb, (1, fan_out), jnp.float32,
                               minval=-bound, maxval=bound)
        params.append((w, b))
    return params


def pack_params(params):
    """One-time prep: zero-pad to lane-aligned shapes, weights -> bf16, biases f32."""
    (w1, b1), (w2, b2), (w3, b3), (w4, b4) = params
    w1p = (jnp.zeros((INPUT_PAD, HIDDEN1), jnp.float32)
           .at[:INPUT_DIM, :].set(w1).astype(jnp.bfloat16))
    w2p = w2.astype(jnp.bfloat16)
    w3p = w3.astype(jnp.bfloat16)
    w4p = (jnp.zeros((HIDDEN3, OUTPUT_PAD), jnp.float32)
           .at[:, :OUTPUT_DIM].set(w4).astype(jnp.bfloat16))
    b4p = jnp.zeros((1, OUTPUT_PAD), jnp.float32).at[:, :OUTPUT_DIM].set(b4)
    return ((w1p, b1), (w2p, b2), (w3p, b3), (w4p, b4p))


def reference_forward(x, packed_params):
    """Pure-JAX reference using the same (bf16-rounded, padded) parameters."""
    (w1, b1), (w2, b2), (w3, b3), (w4, b4) = packed_params
    xf = x.astype(jnp.bfloat16).astype(jnp.float32)
    x_p = jnp.zeros((x.shape[0], INPUT_PAD), jnp.float32).at[:, :INPUT_DIM].set(xf)
    h = jnp.maximum(x_p @ w1.astype(jnp.float32) + b1, 0.0)
    h = jnp.maximum(h @ w2.astype(jnp.float32) + b2, 0.0)
    h = jnp.maximum(h @ w3.astype(jnp.float32) + b3, 0.0)
    out = h @ w4.astype(jnp.float32) + b4
    return out[:, :OUTPUT_DIM]


if __name__ == "__main__":
    key = jax.random.PRNGKey(0)
    key, kx = jax.random.split(key)

    batch = 2
    x = jax.random.normal(kx, (batch, INPUT_DIM), jnp.float32)

    params = init_params(key)
    packed = pack_params(params)   # one-time padding + bf16 cast (amortized)

    out = qnetwork_forward(x, packed)
    out = jax.block_until_ready(out)

    # sanity check against a pure-JAX reference (bf16 weights -> looser tolerance)
    ref = reference_forward(x, packed)
    assert out.shape == (batch, OUTPUT_DIM)
    assert jnp.allclose(out, ref, atol=3e-2, rtol=3e-2), (
        float(jnp.max(jnp.abs(out - ref))))

    print("KERNEL_OK")
</pallas_src>

<mosaic_0001>
module attributes {stable_mosaic.version = 11 : i64} {
  func.func @qnetwork_kernel(%arg0: i32, %arg1: memref<8x384xbf16, #tpu.memory_space<vmem>>, %arg2: memref<384x512xbf16, #tpu.memory_space<vmem>>, %arg3: memref<1x512xf32, #tpu.memory_space<vmem>>, %arg4: memref<512x256xbf16, #tpu.memory_space<vmem>>, %arg5: memref<1x256xf32, #tpu.memory_space<vmem>>, %arg6: memref<256x128xbf16, #tpu.memory_space<vmem>>, %arg7: memref<1x128xf32, #tpu.memory_space<vmem>>, %arg8: memref<128x128xbf16, #tpu.memory_space<vmem>>, %arg9: memref<1x128xf32, #tpu.memory_space<vmem>>, %arg10: memref<8x128xf32, #tpu.memory_space<vmem>>) attributes {dimension_semantics = [#tpu.dimension_semantics<parallel>], iteration_bounds = array<i64: 1>, scalar_prefetch = 0 : i64, scratch_operands = 0 : i64, tpu.core_type = #tpu.core_type<tc>, window_params = [{transform_indices = @transform_0, window_bounds = array<i64: 8, 384>}, {pipeline_mode = #tpu.pipeline_mode<synchronous>, transform_indices = @transform_1, window_bounds = array<i64: 384, 512>}, {pipeline_mode = #tpu.pipeline_mode<synchronous>, transform_indices = @transform_2, window_bounds = array<i64: 1, 512>}, {pipeline_mode = #tpu.pipeline_mode<synchronous>, transform_indices = @transform_3, window_bounds = array<i64: 512, 256>}, {pipeline_mode = #tpu.pipeline_mode<synchronous>, transform_indices = @transform_4, window_bounds = array<i64: 1, 256>}, {pipeline_mode = #tpu.pipeline_mode<synchronous>, transform_indices = @transform_5, window_bounds = array<i64: 256, 128>}, {pipeline_mode = #tpu.pipeline_mode<synchronous>, transform_indices = @transform_6, window_bounds = array<i64: 1, 128>}, {pipeline_mode = #tpu.pipeline_mode<synchronous>, transform_indices = @transform_7, window_bounds = array<i64: 128, 128>}, {pipeline_mode = #tpu.pipeline_mode<synchronous>, transform_indices = @transform_8, window_bounds = array<i64: 1, 128>}, {transform_indices = @transform_9, window_bounds = array<i64: 8, 128>}]} {
    %c0 = arith.constant 0 : index
    %c0_0 = arith.constant 0 : index
    %0 = vector.load %arg1[%c0, %c0_0] : memref<8x384xbf16, #tpu.memory_space<vmem>>, vector<8x384xbf16>
    %c0_1 = arith.constant 0 : index
    %c0_2 = arith.constant 0 : index
    %1 = vector.load %arg2[%c0_1, %c0_2] : memref<384x512xbf16, #tpu.memory_space<vmem>>, vector<384x512xbf16>
    %cst = arith.constant dense<0.000000e+00> : vector<8x512xf32>
    %2 = tpu.matmul %0, %1, %cst {dimension_numbers = #tpu.dot_dimension_numbers<[1], [0], [0], [1], [0, 0, 1, 1], [], []>} : vector<8x384xbf16>, vector<384x512xbf16>, vector<8x512xf32> -> vector<8x512xf32>
    %c0_3 = arith.constant 0 : index
    %c0_4 = arith.constant 0 : index
    %3 = vector.load %arg3[%c0_3, %c0_4] : memref<1x512xf32, #tpu.memory_space<vmem>>, vector<1x512xf32>
    %4 = vector.broadcast %3 : vector<1x512xf32> to vector<8x512xf32>
    %5 = arith.addf %2, %4 : vector<8x512xf32>
    %cst_5 = arith.constant 0.000000e+00 : f32
    %6 = vector.broadcast %cst_5 : f32 to vector<8x512xf32>
    %7 = arith.maximumf %5, %6 : vector<8x512xf32>
    %8 = arith.truncf %7 : vector<8x512xf32> to vector<8x512xbf16>
    %c0_6 = arith.constant 0 : index
    %c0_7 = arith.constant 0 : index
    %9 = vector.load %arg4[%c0_6, %c0_7] : memref<512x256xbf16, #tpu.memory_space<vmem>>, vector<512x256xbf16>
    %cst_8 = arith.constant dense<0.000000e+00> : vector<8x256xf32>
    %10 = tpu.matmul %8, %9, %cst_8 {dimension_numbers = #tpu.dot_dimension_numbers<[1], [0], [0], [1], [0, 0, 1, 1], [], []>} : vector<8x512xbf16>, vector<512x256xbf16>, vector<8x256xf32> -> vector<8x256xf32>
    %c0_9 = arith.constant 0 : index
    %c0_10 = arith.constant 0 : index
    %11 = vector.load %arg5[%c0_9, %c0_10] : memref<1x256xf32, #tpu.memory_space<vmem>>, vector<1x256xf32>
    %12 = vector.broadcast %11 : vector<1x256xf32> to vector<8x256xf32>
    %13 = arith.addf %10, %12 : vector<8x256xf32>
    %cst_11 = arith.constant 0.000000e+00 : f32
    %14 = vector.broadcast %cst_11 : f32 to vector<8x256xf32>
    %15 = arith.maximumf %13, %14 : vector<8x256xf32>
    %16 = arith.truncf %15 : vector<8x256xf32> to vector<8x256xbf16>
    %c0_12 = arith.constant 0 : index
    %c0_13 = arith.constant 0 : index
    %17 = vector.load %arg6[%c0_12, %c0_13] : memref<256x128xbf16, #tpu.memory_space<vmem>>, vector<256x128xbf16>
    %cst_14 = arith.constant dense<0.000000e+00> : vector<8x128xf32>
    %18 = tpu.matmul %16, %17, %cst_14 {dimension_numbers = #tpu.dot_dimension_numbers<[1], [0], [0], [1], [0, 0, 1, 1], [], []>} : vector<8x256xbf16>, vector<256x128xbf16>, vector<8x128xf32> -> vector<8x128xf32>
    %c0_15 = arith.constant 0 : index
    %c0_16 = arith.constant 0 : index
    %19 = vector.load %arg7[%c0_15, %c0_16] : memref<1x128xf32, #tpu.memory_space<vmem>>, vector<1x128xf32>
    %20 = vector.broadcast %19 : vector<1x128xf32> to vector<8x128xf32>
    %21 = arith.addf %18, %20 : vector<8x128xf32>
    %cst_17 = arith.constant 0.000000e+00 : f32
    %22 = vector.broadcast %cst_17 : f32 to vector<8x128xf32>
    %23 = arith.maximumf %21, %22 : vector<8x128xf32>
    %24 = arith.truncf %23 : vector<8x128xf32> to vector<8x128xbf16>
    %c0_18 = arith.constant 0 : index
    %c0_19 = arith.constant 0 : index
    %25 = vector.load %arg8[%c0_18, %c0_19] : memref<128x128xbf16, #tpu.memory_space<vmem>>, vector<128x128xbf16>
    %cst_20 = arith.constant dense<0.000000e+00> : vector<8x128xf32>
    %26 = tpu.matmul %24, %25, %cst_20 {dimension_numbers = #tpu.dot_dimension_numbers<[1], [0], [0], [1], [0, 0, 1, 1], [], []>} : vector<8x128xbf16>, vector<128x128xbf16>, vector<8x128xf32> -> vector<8x128xf32>
    %c0_21 = arith.constant 0 : index
    %c0_22 = arith.constant 0 : index
    %27 = vector.load %arg9[%c0_21, %c0_22] : memref<1x128xf32, #tpu.memory_space<vmem>>, vector<1x128xf32>
    %28 = vector.broadcast %27 : vector<1x128xf32> to vector<8x128xf32>
    %29 = arith.addf %26, %28 : vector<8x128xf32>
    %c0_23 = arith.constant 0 : index
    %c0_24 = arith.constant 0 : index
    %30 = vector.load %arg10[%c0_23, %c0_24] : memref<8x128xf32, #tpu.memory_space<vmem>>, vector<8x128xf32>
    tpu.vector_store %arg10[%c0_23, %c0_24], %29 {strides = array<i32>} : memref<8x128xf32, #tpu.memory_space<vmem>>, vector<8x128xf32>,
    return
  }
  func.func @transform_0(%arg0: i32) -> (i32, i32) {
    %c0_i32 = arith.constant 0 : i32
    %c0_i32_0 = arith.constant 0 : i32
    return %arg0, %c0_i32 : i32, i32
  }
  func.func @transform_1(%arg0: i32) -> (i32, i32) {
    %c0_i32 = arith.constant 0 : i32
    %c0_i32_0 = arith.constant 0 : i32
    %c0_i32_1 = arith.constant 0 : i32
    return %c0_i32, %c0_i32_0 : i32, i32
  }
  func.func @transform_2(%arg0: i32) -> (i32, i32) {
    %c0_i32 = arith.constant 0 : i32
    %c0_i32_0 = arith.constant 0 : i32
    %c0_i32_1 = arith.constant 0 : i32
    return %c0_i32, %c0_i32_0 : i32, i32
  }
  func.func @transform_3(%arg0: i32) -> (i32, i32) {
    %c0_i32 = arith.constant 0 : i32
    %c0_i32_0 = arith.constant 0 : i32
    %c0_i32_1 = arith.constant 0 : i32
    return %c0_i32, %c0_i32_0 : i32, i32
  }
  func.func @transform_4(%arg0: i32) -> (i32, i32) {
    %c0_i32 = arith.constant 0 : i32
    %c0_i32_0 = arith.constant 0 : i32
    %c0_i32_1 = arith.constant 0 : i32
    return %c0_i32, %c0_i32_0 : i32, i32
  }
  func.func @transform_5(%arg0: i32) -> (i32, i32) {
    %c0_i32 = arith.constant 0 : i32
    %c0_i32_0 = arith.constant 0 : i32
    %c0_i32_1 = arith.constant 0 : i32
    return %c0_i32, %c0_i32_0 : i32, i32
  }
  func.func @transform_6(%arg0: i32) -> (i32, i32) {
    %c0_i32 = arith.constant 0 : i32
    %c0_i32_0 = arith.constant 0 : i32
    %c0_i32_1 = arith.constant 0 : i32
    return %c0_i32, %c0_i32_0 : i32, i32
  }
  func.func @transform_7(%arg0: i32) -> (i32, i32) {
    %c0_i32 = arith.constant 0 : i32
    %c0_i32_0 = arith.constant 0 : i32
    %c0_i32_1 = arith.constant 0 : i32
    return %c0_i32, %c0_i32_0 : i32, i32
  }
  func.func @transform_8(%arg0: i32) -> (i32, i32) {
    %c0_i32 = arith.constant 0 : i32
    %c0_i32_0 = arith.constant 0 : i32
    %c0_i32_1 = arith.constant 0 : i32
    return %c0_i32, %c0_i32_0 : i32, i32
  }
  func.func @transform_9(%arg0: i32) -> (i32, i32) {
    %c0_i32 = arith.constant 0 : i32
    %c0_i32_0 = arith.constant 0 : i32
    return %arg0, %c0_i32 : i32, i32
  }
}

</mosaic_0001>

<llo_original>
// kernel: tpu_custom_call.1
$region0: #{tpu_custom_call.1}
  #allocation0 [shape = 'u32[]', space=smem, size = 0x4, offset = 0x4, fixed_abs, tag = 'smem constant byte address 0x4 - core index']
  #allocation1 [shape = 'u32[144,128]{1,0:T(1,128)}', space=vmem, size = 0x12000, scoped, tag = 'internal scratch']
  %s0 = inlined_call_operand.hbm [shape: bf16[8,384], index: 0, kind: input, shape index: {}]
  %s1 = inlined_call_operand.hbm [shape: bf16[384,512], index: 1, kind: input, shape index: {}]
  %s2 = inlined_call_operand.vmem [shape: f32[1,512], index: 2, kind: input, shape index: {}]
  %s3 = inlined_call_operand.hbm [shape: bf16[512,256], index: 3, kind: input, shape index: {}]
  %s4 = inlined_call_operand.vmem [shape: f32[1,256], index: 4, kind: input, shape index: {}]
  %s5 = inlined_call_operand.hbm [shape: bf16[256,128], index: 5, kind: input, shape index: {}]
  %s6 = inlined_call_operand.vmem [shape: f32[1,128], index: 6, kind: input, shape index: {}]
  %s7 = inlined_call_operand.hbm [shape: bf16[128,128], index: 7, kind: input, shape index: {}]
  %s8 = inlined_call_operand.vmem [shape: f32[1,128], index: 8, kind: input, shape index: {}]
  %s9 = inlined_call_operand.hbm [shape: f32[8,128], index: 9, kind: output, shape index: {}]
  %s10 = sld [smem:[#allocation0]]
  $region66: #{tpu_custom_call.1} parent=0
    _
  %s12 = ssub.s32 1, %s10
  %s13 = scalar_select 0, %s12, %s10
  $region1: #{tpu_custom_call.1} parent=0
    #allocation2 [shape = 'u8[6144]{0}', space=vmem, size = 0x1800, scoped, tag = 'input window, operand 0, single buffered']
    #allocation3 [shape = 's32[1]{0}', space=sflag, size = 0x4, scoped, tag = 'scoped memory for tpu_custom_call.1']
    #allocation4 [shape = 's32[1]{0}', space=sflag, size = 0x4, scoped, tag = 'scoped memory for tpu_custom_call.1']
    #allocation5 [shape = 'u8[393216]{0}', space=vmem, size = 0x60000, scoped, tag = 'input window, operand 1, single buffered']
    #allocation6 [shape = 's32[1]{0}', space=sflag, size = 0x4, scoped, tag = 'scoped memory for tpu_custom_call.1']
    #allocation7 [shape = 'u8[262144]{0}', space=vmem, size = 0x40000, scoped, tag = 'input window, operand 3, single buffered']
    #allocation8 [shape = 'u8[65536]{0}', space=vmem, size = 0x10000, scoped, tag = 'input window, operand 5, single buffered']
    #allocation9 [shape = 's32[1]{0}', space=sflag, size = 0x4, scoped, tag = 'scoped memory for tpu_custom_call.1']
    #allocation10 [shape = 'u8[32768]{0}', space=vmem, size = 0x8000, scoped, tag = 'input window, operand 7, single buffered']
    #allocation11 [shape = 'u8[4096]{0}', space=vmem, size = 0x1000, scoped, tag = 'output window, operand 0, single buffered']
    %14 = vsyncpa [#allocation3], 0
    %15 = vsyncpa [#allocation6], 0
    %16 = vsyncpa [#allocation9], 0
    %17 = vsyncpa [#allocation4], 0
    // Predicated region
    $region2: #{tpu_custom_call.1} parent=1 // pred_check
      _
    $region3: #{tpu_custom_call.1} parent=1 // pred_check_branch
      %19 = sbr.rel (0) target = $region5
    $region4: #{tpu_custom_call.1} parent=1 // pred_region
      %s21 = ssub.s32 192, 192
      %22 = vsyncadd [#allocation3], %s21
      %s24 = sshll.u32 [#allocation2], 4
      %s25 = int_to_ptr.vmem [resolvable:$true] %s24
      %27 = dma.hbm_to_vmem [thread:$0]  %s0, 192, %s25, [#allocation3]
    $region5: #{tpu_custom_call.1} parent=1 // pred_fallthru
      _
    // Predicated region
    $region6: #{tpu_custom_call.1} parent=1 // pred_check
      _
    $region7: #{tpu_custom_call.1} parent=1 // pred_check_branch
      %29 = sbr.rel (0) target = $region9
    $region8: #{tpu_custom_call.1} parent=1 // pred_region
      %s31 = ssub.s32 12288, 12288
      %32 = vsyncadd [#allocation6], %s31
      %s33 = sshll.u32 [#allocation5], 4
      %s34 = int_to_ptr.vmem [resolvable:$true] %s33
      %39 = dma.hbm_to_vmem [thread:$0]  %s1, 12288, %s34, [#allocation6], 256, 256, 16
    $region9: #{tpu_custom_call.1} parent=1 // pred_fallthru
      _
    // Predicated region
    $region10: #{tpu_custom_call.1} parent=1 // pred_check
      _
    $region11: #{tpu_custom_call.1} parent=1 // pred_check_branch
      %41 = sbr.rel (0) target = $region13
    $region12: #{tpu_custom_call.1} parent=1 // pred_region
      _
    $region13: #{tpu_custom_call.1} parent=1 // pred_fallthru
      _
    // Predicated region
    $region14: #{tpu_custom_call.1} parent=1 // pred_check
      _
    $region15: #{tpu_custom_call.1} parent=1 // pred_check_branch
      %43 = sbr.rel (0) target = $region17
    $region16: #{tpu_custom_call.1} parent=1 // pred_region
      %s45 = ssub.s32 8192, 8192
      %46 = vsyncadd [#allocation6], %s45
      %s47 = sshll.u32 [#allocation7], 4
      %s48 = int_to_ptr.vmem [resolvable:$true] %s47
      %53 = dma.hbm_to_vmem [thread:$0]  %s3, 8192, %s48, [#allocation6], 128, 128, 8
    $region17: #{tpu_custom_call.1} parent=1 // pred_fallthru
      _
    // Predicated region
    $region18: #{tpu_custom_call.1} parent=1 // pred_check
      _
    $region19: #{tpu_custom_call.1} parent=1 // pred_check_branch
      %55 = sbr.rel (0) target = $region21
    $region20: #{tpu_custom_call.1} parent=1 // pred_region
      _
    $region21: #{tpu_custom_call.1} parent=1 // pred_fallthru
      _
    // Predicated region
    $region22: #{tpu_custom_call.1} parent=1 // pred_check
      _
    $region23: #{tpu_custom_call.1} parent=1 // pred_check_branch
      %57 = sbr.rel (0) target = $region25
    $region24: #{tpu_custom_call.1} parent=1 // pred_region
      %s59 = ssub.s32 2048, 2048
      %60 = vsyncadd [#allocation9], %s59
      %s61 = sshll.u32 [#allocation8], 4
      %s62 = int_to_ptr.vmem [resolvable:$true] %s61
      %67 = dma.hbm_to_vmem [thread:$0]  %s5, 2048, %s62, [#allocation9], 64, 64, 4
    $region25: #{tpu_custom_call.1} parent=1 // pred_fallthru
      _
    // Predicated region
    $region26: #{tpu_custom_call.1} parent=1 // pred_check
      _
    $region27: #{tpu_custom_call.1} parent=1 // pred_check_branch
      %69 = sbr.rel (0) target = $region29
    $region28: #{tpu_custom_call.1} parent=1 // pred_region
      _
    $region29: #{tpu_custom_call.1} parent=1 // pred_fallthru
      _
    // Predicated region
    $region30: #{tpu_custom_call.1} parent=1 // pred_check
      _
    $region31: #{tpu_custom_call.1} parent=1 // pred_check_branch
      %71 = sbr.rel (0) target = $region33
    $region32: #{tpu_custom_call.1} parent=1 // pred_region
      %s73 = ssub.s32 1024, 1024
      %74 = vsyncadd [#allocation9], %s73
      %s75 = sshll.u32 [#allocation10], 4
      %s76 = int_to_ptr.vmem [resolvable:$true] %s75
      %81 = dma.hbm_to_vmem [thread:$0]  %s7, 1024, %s76, [#allocation9], 64, 64, 4
    $region33: #{tpu_custom_call.1} parent=1 // pred_fallthru
      _
    // Predicated region
    $region34: #{tpu_custom_call.1} parent=1 // pred_check
      _
    $region35: #{tpu_custom_call.1} parent=1 // pred_check_branch
      %83 = sbr.rel (0) target = $region37
    $region36: #{tpu_custom_call.1} parent=1 // pred_region
      _
    $region37: #{tpu_custom_call.1} parent=1 // pred_fallthru
      _
    // Predicated region
    $region38: #{tpu_custom_call.1} parent=1 // pred_check
      _
    $region39: #{tpu_custom_call.1} parent=1 // pred_check_branch
      %85 = sbr.rel (0) target = $region41
    $region40: #{tpu_custom_call.1} parent=1 // pred_region
      %86 = dma.done [#allocation3], 192
    $region41: #{tpu_custom_call.1} parent=1 // pred_fallthru
      _
    // Predicated region
    $region42: #{tpu_custom_call.1} parent=1 // pred_check
      _
    $region43: #{tpu_custom_call.1} parent=1 // pred_check_branch
      %88 = sbr.rel (0) target = $region45
    $region44: #{tpu_custom_call.1} parent=1 // pred_region
      %89 = dma.done [#allocation6], 12288
    $region45: #{tpu_custom_call.1} parent=1 // pred_fallthru
      _
    // Predicated region
    $region46: #{tpu_custom_call.1} parent=1 // pred_check
      _
    $region47: #{tpu_custom_call.1} parent=1 // pred_check_branch
      %91 = sbr.rel (0) target = $region49
    $region48: #{tpu_custom_call.1} parent=1 // pred_region
      %92 = dma.done [#allocation6], 8192
    $region49: #{tpu_custom_call.1} parent=1 // pred_fallthru
      _
    // Predicated region
    $region50: #{tpu_custom_call.1} parent=1 // pred_check
      _
    $region51: #{tpu_custom_call.1} parent=1 // pred_check_branch
      %94 = sbr.rel (0) target = $region53
    $region52: #{tpu_custom_call.1} parent=1 // pred_region
      %95 = dma.done [#allocation9], 2048
    $region53: #{tpu_custom_call.1} parent=1 // pred_fallthru
      _
    // Predicated region
    $region54: #{tpu_custom_call.1} parent=1 // pred_check
      _
    $region55: #{tpu_custom_call.1} parent=1 // pred_check_branch
      %97 = sbr.rel (0) target = $region57
    $region56: #{tpu_custom_call.1} parent=1 // pred_region
      %98 = dma.done [#allocation9], 1024
    $region57: #{tpu_custom_call.1} parent=1 // pred_fallthru
      _
    %v100 = vld [vmem:[#allocation2] sm:$0xff]
    %v101 = vld [vmem:[#allocation2 + $0x8] sm:$0xf]
    %v102 = vld [vmem:[#allocation5] sm:$0xff]
    %v103 = vld [vmem:[#allocation5 + $0x8] sm:$0xff]
    %v104 = vld [vmem:[#allocation5 + $0x10] sm:$0xff]
    %v105 = vld [vmem:[#allocation5 + $0x18] sm:$0xff]
    %v106 = vld [vmem:[#allocation5 + $0x20] sm:$0xff]
    %v107 = vld [vmem:[#allocation5 + $0x28] sm:$0xff]
    %v108 = vld [vmem:[#allocation5 + $0x30] sm:$0xff]
    %v109 = vld [vmem:[#allocation5 + $0x38] sm:$0xff]
    %v110 = vld [vmem:[#allocation5 + $0x40] sm:$0xff]
    %v111 = vld [vmem:[#allocation5 + $0x48] sm:$0xff]
    %v112 = vld [vmem:[#allocation5 + $0x50] sm:$0xff]
    %v113 = vld [vmem:[#allocation5 + $0x58] sm:$0xff]
    %v114 = vld [vmem:[#allocation5 + $0x60] sm:$0xff]
    %v115 = vld [vmem:[#allocation5 + $0x68] sm:$0xff]
    %v116 = vld [vmem:[#allocation5 + $0x70] sm:$0xff]
    %v117 = vld [vmem:[#allocation5 + $0x78] sm:$0xff]
    %v118 = vld [vmem:[#allocation5 + $0x80] sm:$0xff]
    %v119 = vld [vmem:[#allocation5 + $0x88] sm:$0xff]
    %v120 = vld [vmem:[#allocation5 + $0x90] sm:$0xff]
    %v121 = vld [vmem:[#allocation5 + $0x98] sm:$0xff]
    %v122 = vld [vmem:[#allocation5 + $0xa0] sm:$0xff]
    %v123 = vld [vmem:[#allocation5 + $0xa8] sm:$0xff]
    %v124 = vld [vmem:[#allocation5 + $0xb0] sm:$0xff]
    %v125 = vld [vmem:[#allocation5 + $0xb8] sm:$0xff]
    %v126 = vld [vmem:[#allocation5 + $0xc0] sm:$0xff]
    %v127 = vld [vmem:[#allocation5 + $0xc8] sm:$0xff]
    %v128 = vld [vmem:[#allocation5 + $0xd0] sm:$0xff]
    %v129 = vld [vmem:[#allocation5 + $0xd8] sm:$0xff]
    %v130 = vld [vmem:[#allocation5 + $0xe0] sm:$0xff]
    %v131 = vld [vmem:[#allocation5 + $0xe8] sm:$0xff]
    %v132 = vld [vmem:[#allocation5 + $0xf0] sm:$0xff]
    %v133 = vld [vmem:[#allocation5 + $0xf8] sm:$0xff]
    %v134 = vld [vmem:[#allocation5 + $0x100] sm:$0xff]
    %v135 = vld [vmem:[#allocation5 + $0x108] sm:$0xff]
    %v136 = vld [vmem:[#allocation5 + $0x110] sm:$0xff]
    %v137 = vld [vmem:[#allocation5 + $0x118] sm:$0xff]
    %v138 = vld [vmem:[#allocation5 + $0x120] sm:$0xff]
    %v139 = vld [vmem:[#allocation5 + $0x128] sm:$0xff]
    %v140 = vld [vmem:[#allocation5 + $0x130] sm:$0xff]
    %v141 = vld [vmem:[#allocation5 + $0x138] sm:$0xff]
    %v142 = vld [vmem:[#allocation5 + $0x140] sm:$0xff]
    %v143 = vld [vmem:[#allocation5 + $0x148] sm:$0xff]
    %v144 = vld [vmem:[#allocation5 + $0x150] sm:$0xff]
    %v145 = vld [vmem:[#allocation5 + $0x158] sm:$0xff]
    %v146 = vld [vmem:[#allocation5 + $0x160] sm:$0xff]
    %v147 = vld [vmem:[#allocation5 + $0x168] sm:$0xff]
    %v148 = vld [vmem:[#allocation5 + $0x170] sm:$0xff]
    %v149 = vld [vmem:[#allocation5 + $0x178] sm:$0xff]
    %v150 = vld [vmem:[#allocation5 + $0x180] sm:$0xff]
    %v151 = vld [vmem:[#allocation5 + $0x188] sm:$0xff]
    %v152 = vld [vmem:[#allocation5 + $0x190] sm:$0xff]
    %v153 = vld [vmem:[#allocation5 + $0x198] sm:$0xff]
    %v154 = vld [vmem:[#allocation5 + $0x1a0] sm:$0xff]
    %v155 = vld [vmem:[#allocation5 + $0x1a8] sm:$0xff]
    %v156 = vld [vmem:[#allocation5 + $0x1b0] sm:$0xff]
    %v157 = vld [vmem:[#allocation5 + $0x1b8] sm:$0xff]
    %v158 = vld [vmem:[#allocation5 + $0x1c0] sm:$0xff]
    %v159 = vld [vmem:[#allocation5 + $0x1c8] sm:$0xff]
    %v160 = vld [vmem:[#allocation5 + $0x1d0] sm:$0xff]
    %v161 = vld [vmem:[#allocation5 + $0x1d8] sm:$0xff]
    %v162 = vld [vmem:[#allocation5 + $0x1e0] sm:$0xff]
    %v163 = vld [vmem:[#allocation5 + $0x1e8] sm:$0xff]
    %v164 = vld [vmem:[#allocation5 + $0x1f0] sm:$0xff]
    %v165 = vld [vmem:[#allocation5 + $0x1f8] sm:$0xff]
    %v166 = vld [vmem:[#allocation5 + $0x200] sm:$0xff]
    %v167 = vld [vmem:[#allocation5 + $0x208] sm:$0xff]
    %v168 = vld [vmem:[#allocation5 + $0x210] sm:$0xff]
    %v169 = vld [vmem:[#allocation5 + $0x218] sm:$0xff]
    %v170 = vld [vmem:[#allocation5 + $0x220] sm:$0xff]
    %v171 = vld [vmem:[#allocation5 + $0x228] sm:$0xff]
    %v172 = vld [vmem:[#allocation5 + $0x230] sm:$0xff]
    %v173 = vld [vmem:[#allocation5 + $0x238] sm:$0xff]
    %v174 = vld [vmem:[#allocation5 + $0x240] sm:$0xff]
    %v175 = vld [vmem:[#allocation5 + $0x248] sm:$0xff]
    %v176 = vld [vmem:[#allocation5 + $0x250] sm:$0xff]
    %v177 = vld [vmem:[#allocation5 + $0x258] sm:$0xff]
    %v178 = vld [vmem:[#allocation5 + $0x260] sm:$0xff]
    %v179 = vld [vmem:[#allocation5 + $0x268] sm:$0xff]
    %v180 = vld [vmem:[#allocation5 + $0x270] sm:$0xff]
    %v181 = vld [vmem:[#allocation5 + $0x278] sm:$0xff]
    %v182 = vld [vmem:[#allocation5 + $0x280] sm:$0xff]
    %v183 = vld [vmem:[#allocation5 + $0x288] sm:$0xff]
    %v184 = vld [vmem:[#allocation5 + $0x290] sm:$0xff]
    %v185 = vld [vmem:[#allocation5 + $0x298] sm:$0xff]
    %v186 = vld [vmem:[#allocation5 + $0x2a0] sm:$0xff]
    %v187 = vld [vmem:[#allocation5 + $0x2a8] sm:$0xff]
    %v188 = vld [vmem:[#allocation5 + $0x2b0] sm:$0xff]
    %v189 = vld [vmem:[#allocation5 + $0x2b8] sm:$0xff]
    %v190 = vld [vmem:[#allocation5 + $0x2c0] sm:$0xff]
    %v191 = vld [vmem:[#allocation5 + $0x2c8] sm:$0xff]
    %v192 = vld [vmem:[#allocation5 + $0x2d0] sm:$0xff]
    %v193 = vld [vmem:[#allocation5 + $0x2d8] sm:$0xff]
    %v194 = vld [vmem:[#allocation5 + $0x2e0] sm:$0xff]
    %v195 = vld [vmem:[#allocation5 + $0x2e8] sm:$0xff]
    %v196 = vld [vmem:[#allocation5 + $0x2f0] sm:$0xff]
    %v197 = vld [vmem:[#allocation5 + $0x2f8] sm:$0xff]
    %v198 = vld [vmem:[%s2] sm:$0xf]
    %v200 = vlaneseq
    %v201 = vshrl.u32 %v200, 7
    %v202 = vsub.s32 0, %v201
    %v203 = vrot.slane %v198, %v202
    %v204 = vlaneseq
    %v205 = vshrl.u32 %v204, 7
    %v206 = vsub.s32 1, %v205
    %v207 = vrot.slane %v198, %v206
    %v208 = vlaneseq
    %v209 = vshrl.u32 %v208, 7
    %v210 = vsub.s32 2, %v209
    %v211 = vrot.slane %v198, %v210
    %v212 = vlaneseq
    %v213 = vshrl.u32 %v212, 7
    %v214 = vsub.s32 3, %v213
    %v215 = vrot.slane %v198, %v214
    %v222 = vunpack.c.l.b16 %v100
    %v223 = vunpack.c.h.b16 %v100
    %v224 = vunpack.c.l.b16 %v101
    %v225 = vpack.c.b16 %v222, %v222
    %v226 = vpack.c.b16 %v223, %v223
    %v227 = vpack.c.b16 %v224, %v224
    %v327 = vunpack.c.l.b16 %v102
    %v328 = vunpack.c.h.b16 %v102
    %v329 = vunpack.c.l.b16 %v103
    %v330 = vunpack.c.h.b16 %v103
    %v331 = vunpack.c.l.b16 %v104
    %v332 = vunpack.c.h.b16 %v104
    %v333 = vunpack.c.l.b16 %v105
    %v334 = vunpack.c.h.b16 %v105
    %v335 = vunpack.c.l.b16 %v106
    %v336 = vunpack.c.h.b16 %v106
    %v337 = vunpack.c.l.b16 %v107
    %v338 = vunpack.c.h.b16 %v107
    %v339 = vunpack.c.l.b16 %v108
    %v340 = vunpack.c.h.b16 %v108
    %v341 = vunpack.c.l.b16 %v109
    %v342 = vunpack.c.h.b16 %v109
    %v343 = vunpack.c.l.b16 %v110
    %v344 = vunpack.c.h.b16 %v110
    %v345 = vunpack.c.l.b16 %v111
    %v346 = vunpack.c.h.b16 %v111
    %v347 = vunpack.c.l.b16 %v112
    %v348 = vunpack.c.h.b16 %v112
    %v349 = vunpack.c.l.b16 %v113
    %v350 = vunpack.c.h.b16 %v113
    %v351 = vunpack.c.l.b16 %v114
    %v352 = vunpack.c.h.b16 %v114
    %v353 = vunpack.c.l.b16 %v115
    %v354 = vunpack.c.h.b16 %v115
    %v355 = vunpack.c.l.b16 %v116
    %v356 = vunpack.c.h.b16 %v116
    %v357 = vunpack.c.l.b16 %v117
    %v358 = vunpack.c.h.b16 %v117
    %v359 = vunpack.c.l.b16 %v118
    %v360 = vunpack.c.h.b16 %v118
    %v361 = vunpack.c.l.b16 %v119
    %v362 = vunpack.c.h.b16 %v119
    %v363 = vunpack.c.l.b16 %v120
    %v364 = vunpack.c.h.b16 %v120
    %v365 = vunpack.c.l.b16 %v121
    %v366 = vunpack.c.h.b16 %v121
    %v367 = vunpack.c.l.b16 %v122
    %v368 = vunpack.c.h.b16 %v122
    %v369 = vunpack.c.l.b16 %v123
    %v370 = vunpack.c.h.b16 %v123
    %v371 = vunpack.c.l.b16 %v124
    %v372 = vunpack.c.h.b16 %v124
    %v373 = vunpack.c.l.b16 %v125
    %v374 = vunpack.c.h.b16 %v125
    %v375 = vunpack.c.l.b16 %v126
    %v376 = vunpack.c.h.b16 %v126
    %v377 = vunpack.c.l.b16 %v127
    %v378 = vunpack.c.h.b16 %v127
    %v379 = vunpack.c.l.b16 %v128
    %v380 = vunpack.c.h.b16 %v128
    %v381 = vunpack.c.l.b16 %v129
    %v382 = vunpack.c.h.b16 %v129
    %v383 = vunpack.c.l.b16 %v130
    %v384 = vunpack.c.h.b16 %v130
    %v385 = vunpack.c.l.b16 %v131
    %v386 = vunpack.c.h.b16 %v131
    %v387 = vunpack.c.l.b16 %v132
    %v388 = vunpack.c.h.b16 %v132
    %v389 = vunpack.c.l.b16 %v133
    %v390 = vunpack.c.h.b16 %v133
    %v391 = vunpack.c.l.b16 %v134
    %v392 = vunpack.c.h.b16 %v134
    %v393 = vunpack.c.l.b16 %v135
    %v394 = vunpack.c.h.b16 %v135
    %v395 = vunpack.c.l.b16 %v136
    %v396 = vunpack.c.h.b16 %v136
    %v397 = vunpack.c.l.b16 %v137
    %v398 = vunpack.c.h.b16 %v137
    %v399 = vunpack.c.l.b16 %v138
    %v400 = vunpack.c.h.b16 %v138
    %v401 = vunpack.c.l.b16 %v139
    %v402 = vunpack.c.h.b16 %v139
    %v403 = vunpack.c.l.b16 %v140
    %v404 = vunpack.c.h.b16 %v140
    %v405 = vunpack.c.l.b16 %v141
    %v406 = vunpack.c.h.b16 %v141
    %v407 = vunpack.c.l.b16 %v142
    %v408 = vunpack.c.h.b16 %v142
    %v409 = vunpack.c.l.b16 %v143
    %v410 = vunpack.c.h.b16 %v143
    %v411 = vunpack.c.l.b16 %v144
    %v412 = vunpack.c.h.b16 %v144
    %v413 = vunpack.c.l.b16 %v145
    %v414 = vunpack.c.h.b16 %v145
    %v415 = vunpack.c.l.b16 %v146
    %v416 = vunpack.c.h.b16 %v146
    %v417 = vunpack.c.l.b16 %v147
    %v418 = vunpack.c.h.b16 %v147
    %v419 = vunpack.c.l.b16 %v148
    %v420 = vunpack.c.h.b16 %v148
    %v421 = vunpack.c.l.b16 %v149
    %v422 = vunpack.c.h.b16 %v149
    %v423 = vunpack.c.l.b16 %v150
    %v424 = vunpack.c.h.b16 %v150
    %v425 = vunpack.c.l.b16 %v151
    %v426 = vunpack.c.h.b16 %v151
    %v427 = vunpack.c.l.b16 %v152
    %v428 = vunpack.c.h.b16 %v152
    %v429 = vunpack.c.l.b16 %v153
    %v430 = vunpack.c.h.b16 %v153
    %v431 = vunpack.c.l.b16 %v154
    %v432 = vunpack.c.h.b16 %v154
    %v433 = vunpack.c.l.b16 %v155
    %v434 = vunpack.c.h.b16 %v155
    %v435 = vunpack.c.l.b16 %v156
    %v436 = vunpack.c.h.b16 %v156
    %v437 = vunpack.c.l.b16 %v157
    %v438 = vunpack.c.h.b16 %v157
    %v439 = vunpack.c.l.b16 %v158
    %v440 = vunpack.c.h.b16 %v158
    %v441 = vunpack.c.l.b16 %v159
    %v442 = vunpack.c.h.b16 %v159
    %v443 = vunpack.c.l.b16 %v160
    %v444 = vunpack.c.h.b16 %v160
    %v445 = vunpack.c.l.b16 %v161
    %v446 = vunpack.c.h.b16 %v161
    %v447 = vunpack.c.l.b16 %v162
    %v448 = vunpack.c.h.b16 %v162
    %v449 = vunpack.c.l.b16 %v163
    %v450 = vunpack.c.h.b16 %v163
    %v451 = vunpack.c.l.b16 %v164
    %v452 = vunpack.c.h.b16 %v164
    %v453 = vunpack.c.l.b16 %v165
    %v454 = vunpack.c.h.b16 %v165
    %v455 = vunpack.c.l.b16 %v166
    %v456 = vunpack.c.h.b16 %v166
    %v457 = vunpack.c.l.b16 %v167
    %v458 = vunpack.c.h.b16 %v167
    %v459 = vunpack.c.l.b16 %v168
    %v460 = vunpack.c.h.b16 %v168
    %v461 = vunpack.c.l.b16 %v169
    %v462 = vunpack.c.h.b16 %v169
    %v463 = vunpack.c.l.b16 %v170
    %v464 = vunpack.c.h.b16 %v170
    %v465 = vunpack.c.l.b16 %v171
    %v466 = vunpack.c.h.b16 %v171
    %v467 = vunpack.c.l.b16 %v172
    %v468 = vunpack.c.h.b16 %v172
    %v469 = vunpack.c.l.b16 %v173
    %v470 = vunpack.c.h.b16 %v173
    %v471 = vunpack.c.l.b16 %v174
    %v472 = vunpack.c.h.b16 %v174
    %v473 = vunpack.c.l.b16 %v175
    %v474 = vunpack.c.h.b16 %v175
    %v475 = vunpack.c.l.b16 %v176
    %v476 = vunpack.c.h.b16 %v176
    %v477 = vunpack.c.l.b16 %v177
    %v478 = vunpack.c.h.b16 %v177
    %v479 = vunpack.c.l.b16 %v178
    %v480 = vunpack.c.h.b16 %v178
    %v481 = vunpack.c.l.b16 %v179
    %v482 = vunpack.c.h.b16 %v179
    %v483 = vunpack.c.l.b16 %v180
    %v484 = vunpack.c.h.b16 %v180
    %v485 = vunpack.c.l.b16 %v181
    %v486 = vunpack.c.h.b16 %v181
    %v487 = vunpack.c.l.b16 %v182
    %v488 = vunpack.c.h.b16 %v182
    %v489 = vunpack.c.l.b16 %v183
    %v490 = vunpack.c.h.b16 %v183
    %v491 = vunpack.c.l.b16 %v184
    %v492 = vunpack.c.h.b16 %v184
    %v493 = vunpack.c.l.b16 %v185
    %v494 = vunpack.c.h.b16 %v185
    %v495 = vunpack.c.l.b16 %v186
    %v496 = vunpack.c.h.b16 %v186
    %v497 = vunpack.c.l.b16 %v187
    %v498 = vunpack.c.h.b16 %v187
    %v499 = vunpack.c.l.b16 %v188
    %v500 = vunpack.c.h.b16 %v188
    %v501 = vunpack.c.l.b16 %v189
    %v502 = vunpack.c.h.b16 %v189
    %v503 = vunpack.c.l.b16 %v190
    %v504 = vunpack.c.h.b16 %v190
    %v505 = vunpack.c.l.b16 %v191
    %v506 = vunpack.c.h.b16 %v191
    %v507 = vunpack.c.l.b16 %v192
    %v508 = vunpack.c.h.b16 %v192
    %v509 = vunpack.c.l.b16 %v193
    %v510 = vunpack.c.h.b16 %v193
    %v511 = vunpack.c.l.b16 %v194
    %v512 = vunpack.c.h.b16 %v194
    %v513 = vunpack.c.l.b16 %v195
    %v514 = vunpack.c.h.b16 %v195
    %v515 = vunpack.c.l.b16 %v196
    %v516 = vunpack.c.h.b16 %v196
    %v517 = vunpack.c.l.b16 %v197
    %v518 = vunpack.c.h.b16 %v197
    %v519 = vpack.c.b16 %v331, %v327
    %v520 = vpack.c.b16 %v332, %v328
    %v521 = vpack.c.b16 %v333, %v329
    %v522 = vpack.c.b16 %v334, %v330
    %v523 = vpack.c.b16 %v339, %v335
    %v524 = vpack.c.b16 %v340, %v336
    %v525 = vpack.c.b16 %v341, %v337
    %v526 = vpack.c.b16 %v342, %v338
    %v527 = vpack.c.b16 %v347, %v343
    %v528 = vpack.c.b16 %v348, %v344
    %v529 = vpack.c.b16 %v349, %v345
    %v530 = vpack.c.b16 %v350, %v346
    %v531 = vpack.c.b16 %v355, %v351
    %v532 = vpack.c.b16 %v356, %v352
    %v533 = vpack.c.b16 %v357, %v353
    %v534 = vpack.c.b16 %v358, %v354
    %v535 = vpack.c.b16 %v363, %v359
    %v536 = vpack.c.b16 %v364, %v360
    %v537 = vpack.c.b16 %v365, %v361
    %v538 = vpack.c.b16 %v366, %v362
    %v539 = vpack.c.b16 %v371, %v367
    %v540 = vpack.c.b16 %v372, %v368
    %v541 = vpack.c.b16 %v373, %v369
    %v542 = vpack.c.b16 %v374, %v370
    %v543 = vpack.c.b16 %v379, %v375
    %v544 = vpack.c.b16 %v380, %v376
    %v545 = vpack.c.b16 %v381, %v377
    %v546 = vpack.c.b16 %v382, %v378
    %v547 = vpack.c.b16 %v387, %v383
    %v548 = vpack.c.b16 %v388, %v384
    %v549 = vpack.c.b16 %v389, %v385
    %v550 = vpack.c.b16 %v390, %v386
    %v551 = vpack.c.b16 %v395, %v391
    %v552 = vpack.c.b16 %v396, %v392
    %v553 = vpack.c.b16 %v397, %v393
    %v554 = vpack.c.b16 %v398, %v394
    %v555 = vpack.c.b16 %v403, %v399
    %v556 = vpack.c.b16 %v404, %v400
    %v557 = vpack.c.b16 %v405, %v401
    %v558 = vpack.c.b16 %v406, %v402
    %v559 = vpack.c.b16 %v411, %v407
    %v560 = vpack.c.b16 %v412, %v408
    %v561 = vpack.c.b16 %v413, %v409
    %v562 = vpack.c.b16 %v414, %v410
    %v563 = vpack.c.b16 %v419, %v415
    %v564 = vpack.c.b16 %v420, %v416
    %v565 = vpack.c.b16 %v421, %v417
    %v566 = vpack.c.b16 %v422, %v418
    %v567 = vpack.c.b16 %v427, %v423
    %v568 = vpack.c.b16 %v428, %v424
    %v569 = vpack.c.b16 %v429, %v425
    %v570 = vpack.c.b16 %v430, %v426
    %v571 = vpack.c.b16 %v435, %v431
    %v572 = vpack.c.b16 %v436, %v432
    %v573 = vpack.c.b16 %v437, %v433
    %v574 = vpack.c.b16 %v438, %v434
    %v575 = vpack.c.b16 %v443, %v439
    %v576 = vpack.c.b16 %v444, %v440
    %v577 = vpack.c.b16 %v445, %v441
    %v578 = vpack.c.b16 %v446, %v442
    %v579 = vpack.c.b16 %v451, %v447
    %v580 = vpack.c.b16 %v452, %v448
    %v581 = vpack.c.b16 %v453, %v449
    %v582 = vpack.c.b16 %v454, %v450
    %v583 = vpack.c.b16 %v459, %v455
    %v584 = vpack.c.b16 %v460, %v456
    %v585 = vpack.c.b16 %v461, %v457
    %v586 = vpack.c.b16 %v462, %v458
    %v587 = vpack.c.b16 %v467, %v463
    %v588 = vpack.c.b16 %v468, %v464
    %v589 = vpack.c.b16 %v469, %v465
    %v590 = vpack.c.b16 %v470, %v466
    %v591 = vpack.c.b16 %v475, %v471
    %v592 = vpack.c.b16 %v476, %v472
    %v593 = vpack.c.b16 %v477, %v473
    %v594 = vpack.c.b16 %v478, %v474
    %v595 = vpack.c.b16 %v483, %v479
    %v596 = vpack.c.b16 %v484, %v480
    %v597 = vpack.c.b16 %v485, %v481
    %v598 = vpack.c.b16 %v486, %v482
    %v599 = vpack.c.b16 %v491, %v487
    %v600 = vpack.c.b16 %v492, %v488
    %v601 = vpack.c.b16 %v493, %v489
    %v602 = vpack.c.b16 %v494, %v490
    %v603 = vpack.c.b16 %v499, %v495
    %v604 = vpack.c.b16 %v500, %v496
    %v605 = vpack.c.b16 %v501, %v497
    %v606 = vpack.c.b16 %v502, %v498
    %v607 = vpack.c.b16 %v507, %v503
    %v608 = vpack.c.b16 %v508, %v504
    %v609 = vpack.c.b16 %v509, %v505
    %v610 = vpack.c.b16 %v510, %v506
    %v611 = vpack.c.b16 %v515, %v511
    %v612 = vpack.c.b16 %v516, %v512
    %v613 = vpack.c.b16 %v517, %v513
    %v614 = vpack.c.b16 %v518, %v514
    %711 = vmatprep.subr.bf16.mxu0 %v520
    %712 = vmatpush1.bf16.msra.mxu0 %v519
    %713 = vmatprep.subr.bf16.mxu0 %v524
    %714 = vmatpush1.bf16.msra.mxu0 %v523
    %715 = vmatprep.subr.bf16.mxu0 %v528
    %716 = vmatpush1.bf16.msra.mxu0 %v527
    %717 = vmatprep.subr.bf16.mxu0 %v532
    %718 = vmatpush1.bf16.msra.mxu0 %v531
    %719 = vmatprep.subr.bf16.mxu0 %v536
    %720 = vmatpush1.bf16.msra.mxu0 %v535
    %721 = vmatprep.subr.bf16.mxu0 %v540
    %722 = vmatpush1.bf16.msra.mxu0 %v539
    %723 = vmatprep.subr.bf16.mxu0 %v544
    %724 = vmatpush1.bf16.msra.mxu0 %v543
    %725 = vmatprep.subr.bf16.mxu0 %v548
    %726 = vmatpush1.bf16.msra.mxu0 %v547
    %727 = vmatprep.subr.bf16.mxu0 %v552
    %728 = vmatpush1.bf16.msra.mxu0 %v551
    %729 = vmatprep.subr.bf16.mxu0 %v556
    %730 = vmatpush1.bf16.msra.mxu0 %v555
    %731 = vmatprep.subr.bf16.mxu0 %v560
    %732 = vmatpush1.bf16.msra.mxu0 %v559
    %733 = vmatprep.subr.bf16.mxu0 %v564
    %734 = vmatpush1.bf16.msra.mxu0 %v563
    %735 = vmatprep.subr.bf16.mxu0 %v568
    %736 = vmatpush1.bf16.msra.mxu0 %v567
    %737 = vmatprep.subr.bf16.mxu0 %v572
    %738 = vmatpush1.bf16.msra.mxu0 %v571
    %739 = vmatprep.subr.bf16.mxu0 %v576
    %740 = vmatpush1.bf16.msra.mxu0 %v575
    %741 = vmatprep.subr.bf16.mxu0 %v580
    %742 = vmatpush1.bf16.msra.mxu0 %v579
    %743 = vmatprep.mubr.bf16.mxu0 %v226
    %744 = vmatmul.mubr.bf16.gmra.mrb[0].mxu0 %v225
    %v745 = vpop.f32.mrb[0].mxu0
    %v746 = vadd.f32 %v203, %v745
    %v747 = vpop.f32.mrb[0].mxu0
    %v748 = vadd.f32 %v207, %v747
    %v749 = vpop.f32.mrb[0].mxu0
    %v750 = vpop.f32.mrb[0].mxu0
    %751 = vdwg.mxu0
    %752 = vmatprep.subr.bf16.mxu0 %v584
    %753 = vmatpush1.bf16.msra.mxu0 %v583
    %754 = vmatprep.subr.bf16.mxu0 %v588
    %755 = vmatpush1.bf16.msra.mxu0 %v587
    %756 = vmatprep.subr.bf16.mxu0 %v592
    %757 = vmatpush1.bf16.msra.mxu0 %v591
    %758 = vmatprep.subr.bf16.mxu0 %v596
    %759 = vmatpush1.bf16.msra.mxu0 %v595
    %760 = vmatprep.subr.bf16.mxu0 %v600
    %761 = vmatpush1.bf16.msra.mxu0 %v599
    %762 = vmatprep.subr.bf16.mxu0 %v604
    %763 = vmatpush1.bf16.msra.mxu0 %v603
    %764 = vmatprep.subr.bf16.mxu0 %v608
    %765 = vmatpush1.bf16.msra.mxu0 %v607
    %766 = vmatprep.subr.bf16.mxu0 %v612
    %767 = vmatpush1.bf16.msra.mxu0 %v611
    %768 = vmatprep.subr.bf16.mxu0 0
    %769 = vmatpush1.bf16.msra.mxu0 0
    %770 = vmatprep.subr.bf16.mxu0 0
    %771 = vmatpush1.bf16.msra.mxu0 0
    %772 = vmatprep.subr.bf16.mxu0 0
    %773 = vmatpush1.bf16.msra.mxu0 0
    %774 = vmatprep.subr.bf16.mxu0 0
    %775 = vmatpush1.bf16.msra.mxu0 0
    %776 = vmatprep.subr.bf16.mxu0 0
    %777 = vmatpush1.bf16.msra.mxu0 0
    %778 = vmatprep.subr.bf16.mxu0 0
    %779 = vmatpush1.bf16.msra.mxu0 0
    %780 = vmatprep.subr.bf16.mxu0 0
    %781 = vmatpush1.bf16.msra.mxu0 0
    %782 = vmatprep.subr.bf16.mxu0 0
    %783 = vmatpush1.bf16.msra.mxu0 0
    %784 = vmatprep.mubr.bf16.mxu0 0
    %785 = vmatmul.mubr.bf16.gmra.mrb[0].mxu0 %v227
    %v786 = vpop.f32.mrb[0].mxu0
    %v787 = vadd.f32 %v746, %v786
    %v788 = vpop.f32.mrb[0].mxu0
    %v789 = vadd.f32 %v748, %v788
    %v790 = vpop.f32.mrb[0].mxu0
    %v791 = vpop.f32.mrb[0].mxu0
    %792 = vdwg.mxu0
    %793 = vmatprep.subr.bf16.mxu0 %v522
    %794 = vmatpush1.bf16.msra.mxu0 %v521
    %795 = vmatprep.subr.bf16.mxu0 %v526
    %796 = vmatpush1.bf16.msra.mxu0 %v525
    %797 = vmatprep.subr.bf16.mxu0 %v530
    %798 = vmatpush1.bf16.msra.mxu0 %v529
    %799 = vmatprep.subr.bf16.mxu0 %v534
    %800 = vmatpush1.bf16.msra.mxu0 %v533
    %801 = vmatprep.subr.bf16.mxu0 %v538
    %802 = vmatpush1.bf16.msra.mxu0 %v537
    %803 = vmatprep.subr.bf16.mxu0 %v542
    %804 = vmatpush1.bf16.msra.mxu0 %v541
    %805 = vmatprep.subr.bf16.mxu0 %v546
    %806 = vmatpush1.bf16.msra.mxu0 %v545
    %807 = vmatprep.subr.bf16.mxu0 %v550
    %808 = vmatpush1.bf16.msra.mxu0 %v549
    %809 = vmatprep.subr.bf16.mxu0 %v554
    %810 = vmatpush1.bf16.msra.mxu0 %v553
    %811 = vmatprep.subr.bf16.mxu0 %v558
    %812 = vmatpush1.bf16.msra.mxu0 %v557
    %813 = vmatprep.subr.bf16.mxu0 %v562
    %814 = vmatpush1.bf16.msra.mxu0 %v561
    %815 = vmatprep.subr.bf16.mxu0 %v566
    %816 = vmatpush1.bf16.msra.mxu0 %v565
    %817 = vmatprep.subr.bf16.mxu0 %v570
    %818 = vmatpush1.bf16.msra.mxu0 %v569
    %819 = vmatprep.subr.bf16.mxu0 %v574
    %820 = vmatpush1.bf16.msra.mxu0 %v573
    %821 = vmatprep.subr.bf16.mxu0 %v578
    %822 = vmatpush1.bf16.msra.mxu0 %v577
    %823 = vmatprep.subr.bf16.mxu0 %v582
    %824 = vmatpush1.bf16.msra.mxu0 %v581
    %825 = vmatprep.mubr.bf16.mxu0 %v226
    %826 = vmatmul.mubr.bf16.gmra.mrb[0].mxu0 %v225
    %v827 = vpop.f32.mrb[0].mxu0
    %v828 = vadd.f32 %v211, %v827
    %v829 = vpop.f32.mrb[0].mxu0
    %v830 = vadd.f32 %v215, %v829
    %v831 = vpop.f32.mrb[0].mxu0
    %v832 = vpop.f32.mrb[0].mxu0
    %833 = vdwg.mxu0
    %834 = vmatprep.subr.bf16.mxu0 %v586
    %835 = vmatpush1.bf16.msra.mxu0 %v585
    %836 = vmatprep.subr.bf16.mxu0 %v590
    %837 = vmatpush1.bf16.msra.mxu0 %v589
    %838 = vmatprep.subr.bf16.mxu0 %v594
    %839 = vmatpush1.bf16.msra.mxu0 %v593
    %840 = vmatprep.subr.bf16.mxu0 %v598
    %841 = vmatpush1.bf16.msra.mxu0 %v597
    %842 = vmatprep.subr.bf16.mxu0 %v602
    %843 = vmatpush1.bf16.msra.mxu0 %v601
    %844 = vmatprep.subr.bf16.mxu0 %v606
    %845 = vmatpush1.bf16.msra.mxu0 %v605
    %846 = vmatprep.subr.bf16.mxu0 %v610
    %847 = vmatpush1.bf16.msra.mxu0 %v609
    %848 = vmatprep.subr.bf16.mxu0 %v614
    %849 = vmatpush1.bf16.msra.mxu0 %v613
    %850 = vmatprep.subr.bf16.mxu0 0
    %851 = vmatpush1.bf16.msra.mxu0 0
    %852 = vmatprep.subr.bf16.mxu0 0
    %853 = vmatpush1.bf16.msra.mxu0 0
    %854 = vmatprep.subr.bf16.mxu0 0
    %855 = vmatpush1.bf16.msra.mxu0 0
    %856 = vmatprep.subr.bf16.mxu0 0
    %857 = vmatpush1.bf16.msra.mxu0 0
    %858 = vmatprep.subr.bf16.mxu0 0
    %859 = vmatpush1.bf16.msra.mxu0 0
    %860 = vmatprep.subr.bf16.mxu0 0
    %861 = vmatpush1.bf16.msra.mxu0 0
    %862 = vmatprep.subr.bf16.mxu0 0
    %863 = vmatpush1.bf16.msra.mxu0 0
    %864 = vmatprep.subr.bf16.mxu0 0
    %865 = vmatpush1.bf16.msra.mxu0 0
    %866 = vmatprep.mubr.bf16.mxu0 0
    %867 = vmatmul.mubr.bf16.gmra.mrb[0].mxu0 %v227
    %v868 = vpop.f32.mrb[0].mxu0
    %v869 = vadd.f32 %v828, %v868
    %v870 = vpop.f32.mrb[0].mxu0
    %v871 = vadd.f32 %v830, %v870
    %v872 = vpop.f32.mrb[0].mxu0
    %v873 = vpop.f32.mrb[0].mxu0
    %874 = vdwg.mxu0
    %v875 = vmax.f32 %v787, 0.0
    %v876 = vmax.f32 %v789, 0.0
    %v877 = vmax.f32 %v869, 0.0
    %v878 = vmax.f32 %v871, 0.0
    %v879 = vpack.c.bf16 %v875, %v875
    %v880 = vpack.c.bf16 %v876, %v876
    %v881 = vpack.c.bf16 %v877, %v877
    %v882 = vpack.c.bf16 %v878, %v878
    %v883 = vld [vmem:[#allocation7] sm:$0xff]
    %v884 = vld [vmem:[#allocation7 + $0x8] sm:$0xff]
    %v885 = vld [vmem:[#allocation7 + $0x10] sm:$0xff]
    %v886 = vld [vmem:[#allocation7 + $0x18] sm:$0xff]
    %v887 = vld [vmem:[#allocation7 + $0x20] sm:$0xff]
    %v888 = vld [vmem:[#allocation7 + $0x28] sm:$0xff]
    %v889 = vld [vmem:[#allocation7 + $0x30] sm:$0xff]
    %v890 = vld [vmem:[#allocation7 + $0x38] sm:$0xff]
    %v891 = vld [vmem:[#allocation7 + $0x40] sm:$0xff]
    %v892 = vld [vmem:[#allocation7 + $0x48] sm:$0xff]
    %v893 = vld [vmem:[#allocation7 + $0x50] sm:$0xff]
    %v894 = vld [vmem:[#allocation7 + $0x58] sm:$0xff]
    %v895 = vld [vmem:[#allocation7 + $0x60] sm:$0xff]
    %v896 = vld [vmem:[#allocation7 + $0x68] sm:$0xff]
    %v897 = vld [vmem:[#allocation7 + $0x70] sm:$0xff]
    %v898 = vld [vmem:[#allocation7 + $0x78] sm:$0xff]
    %v899 = vld [vmem:[#allocation7 + $0x80] sm:$0xff]
    %v900 = vld [vmem:[#allocation7 + $0x88] sm:$0xff]
    %v901 = vld [vmem:[#allocation7 + $0x90] sm:$0xff]
    %v902 = vld [vmem:[#allocation7 + $0x98] sm:$0xff]
    %v903 = vld [vmem:[#allocation7 + $0xa0] sm:$0xff]
    %v904 = vld [vmem:[#allocation7 + $0xa8] sm:$0xff]
    %v905 = vld [vmem:[#allocation7 + $0xb0] sm:$0xff]
    %v906 = vld [vmem:[#allocation7 + $0xb8] sm:$0xff]
    %v907 = vld [vmem:[#allocation7 + $0xc0] sm:$0xff]
    %v908 = vld [vmem:[#allocation7 + $0xc8] sm:$0xff]
    %v909 = vld [vmem:[#allocation7 + $0xd0] sm:$0xff]
    %v910 = vld [vmem:[#allocation7 + $0xd8] sm:$0xff]
    %v911 = vld [vmem:[#allocation7 + $0xe0] sm:$0xff]
    %v912 = vld [vmem:[#allocation7 + $0xe8] sm:$0xff]
    %v913 = vld [vmem:[#allocation7 + $0xf0] sm:$0xff]
    %v914 = vld [vmem:[#allocation7 + $0xf8] sm:$0xff]
    %v915 = vld [vmem:[#allocation7 + $0x100] sm:$0xff]
    %v916 = vld [vmem:[#allocation7 + $0x108] sm:$0xff]
    %v917 = vld [vmem:[#allocation7 + $0x110] sm:$0xff]
    %v918 = vld [vmem:[#allocation7 + $0x118] sm:$0xff]
    %v919 = vld [vmem:[#allocation7 + $0x120] sm:$0xff]
    %v920 = vld [vmem:[#allocation7 + $0x128] sm:$0xff]
    %v921 = vld [vmem:[#allocation7 + $0x130] sm:$0xff]
    %v922 = vld [vmem:[#allocation7 + $0x138] sm:$0xff]
    %v923 = vld [vmem:[#allocation7 + $0x140] sm:$0xff]
    %v924 = vld [vmem:[#allocation7 + $0x148] sm:$0xff]
    %v925 = vld [vmem:[#allocation7 + $0x150] sm:$0xff]
    %v926 = vld [vmem:[#allocation7 + $0x158] sm:$0xff]
    %v927 = vld [vmem:[#allocation7 + $0x160] sm:$0xff]
    %v928 = vld [vmem:[#allocation7 + $0x168] sm:$0xff]
    %v929 = vld [vmem:[#allocation7 + $0x170] sm:$0xff]
    %v930 = vld [vmem:[#allocation7 + $0x178] sm:$0xff]
    %v931 = vld [vmem:[#allocation7 + $0x180] sm:$0xff]
    %v932 = vld [vmem:[#allocation7 + $0x188] sm:$0xff]
    %v933 = vld [vmem:[#allocation7 + $0x190] sm:$0xff]
    %v934 = vld [vmem:[#allocation7 + $0x198] sm:$0xff]
    %v935 = vld [vmem:[#allocation7 + $0x1a0] sm:$0xff]
    %v936 = vld [vmem:[#allocation7 + $0x1a8] sm:$0xff]
    %v937 = vld [vmem:[#allocation7 + $0x1b0] sm:$0xff]
    %v938 = vld [vmem:[#allocation7 + $0x1b8] sm:$0xff]
    %v939 = vld [vmem:[#allocation7 + $0x1c0] sm:$0xff]
    %v940 = vld [vmem:[#allocation7 + $0x1c8] sm:$0xff]
    %v941 = vld [vmem:[#allocation7 + $0x1d0] sm:$0xff]
    %v942 = vld [vmem:[#allocation7 + $0x1d8] sm:$0xff]
    %v943 = vld [vmem:[#allocation7 + $0x1e0] sm:$0xff]
    %v944 = vld [vmem:[#allocation7 + $0x1e8] sm:$0xff]
    %v945 = vld [vmem:[#allocation7 + $0x1f0] sm:$0xff]
    %v946 = vld [vmem:[#allocation7 + $0x1f8] sm:$0xff]
    %v947 = vld [vmem:[%s4] sm:$0x3]
    %v949 = vlaneseq
    %v950 = vshrl.u32 %v949, 7
    %v951 = vsub.s32 0, %v950
    %v952 = vrot.slane %v947, %v951
    %v953 = vlaneseq
    %v954 = vshrl.u32 %v953, 7
    %v955 = vsub.s32 1, %v954
    %v956 = vrot.slane %v947, %v955
    %v1023 = vunpack.c.l.b16 %v883
    %v1024 = vunpack.c.h.b16 %v883
    %v1025 = vunpack.c.l.b16 %v884
    %v1026 = vunpack.c.h.b16 %v884
    %v1027 = vunpack.c.l.b16 %v885
    %v1028 = vunpack.c.h.b16 %v885
    %v1029 = vunpack.c.l.b16 %v886
    %v1030 = vunpack.c.h.b16 %v886
    %v1031 = vunpack.c.l.b16 %v887
    %v1032 = vunpack.c.h.b16 %v887
    %v1033 = vunpack.c.l.b16 %v888
    %v1034 = vunpack.c.h.b16 %v888
    %v1035 = vunpack.c.l.b16 %v889
    %v1036 = vunpack.c.h.b16 %v889
    %v1037 = vunpack.c.l.b16 %v890
    %v1038 = vunpack.c.h.b16 %v890
    %v1039 = vunpack.c.l.b16 %v891
    %v1040 = vunpack.c.h.b16 %v891
    %v1041 = vunpack.c.l.b16 %v892
    %v1042 = vunpack.c.h.b16 %v892
    %v1043 = vunpack.c.l.b16 %v893
    %v1044 = vunpack.c.h.b16 %v893
    %v1045 = vunpack.c.l.b16 %v894
    %v1046 = vunpack.c.h.b16 %v894
    %v1047 = vunpack.c.l.b16 %v895
    %v1048 = vunpack.c.h.b16 %v895
    %v1049 = vunpack.c.l.b16 %v896
    %v1050 = vunpack.c.h.b16 %v896
    %v1051 = vunpack.c.l.b16 %v897
    %v1052 = vunpack.c.h.b16 %v897
    %v1053 = vunpack.c.l.b16 %v898
    %v1054 = vunpack.c.h.b16 %v898
    %v1055 = vunpack.c.l.b16 %v899
    %v1056 = vunpack.c.h.b16 %v899
    %v1057 = vunpack.c.l.b16 %v900
    %v1058 = vunpack.c.h.b16 %v900
    %v1059 = vunpack.c.l.b16 %v901
    %v1060 = vunpack.c.h.b16 %v901
    %v1061 = vunpack.c.l.b16 %v902
    %v1062 = vunpack.c.h.b16 %v902
    %v1063 = vunpack.c.l.b16 %v903
    %v1064 = vunpack.c.h.b16 %v903
    %v1065 = vunpack.c.l.b16 %v904
    %v1066 = vunpack.c.h.b16 %v904
    %v1067 = vunpack.c.l.b16 %v905
    %v1068 = vunpack.c.h.b16 %v905
    %v1069 = vunpack.c.l.b16 %v906
    %v1070 = vunpack.c.h.b16 %v906
    %v1071 = vunpack.c.l.b16 %v907
    %v1072 = vunpack.c.h.b16 %v907
    %v1073 = vunpack.c.l.b16 %v908
    %v1074 = vunpack.c.h.b16 %v908
    %v1075 = vunpack.c.l.b16 %v909
    %v1076 = vunpack.c.h.b16 %v909
    %v1077 = vunpack.c.l.b16 %v910
    %v1078 = vunpack.c.h.b16 %v910
    %v1079 = vunpack.c.l.b16 %v911
    %v1080 = vunpack.c.h.b16 %v911
    %v1081 = vunpack.c.l.b16 %v912
    %v1082 = vunpack.c.h.b16 %v912
    %v1083 = vunpack.c.l.b16 %v913
    %v1084 = vunpack.c.h.b16 %v913
    %v1085 = vunpack.c.l.b16 %v914
    %v1086 = vunpack.c.h.b16 %v914
    %v1087 = vunpack.c.l.b16 %v915
    %v1088 = vunpack.c.h.b16 %v915
    %v1089 = vunpack.c.l.b16 %v916
    %v1090 = vunpack.c.h.b16 %v916
    %v1091 = vunpack.c.l.b16 %v917
    %v1092 = vunpack.c.h.b16 %v917
    %v1093 = vunpack.c.l.b16 %v918
    %v1094 = vunpack.c.h.b16 %v918
    %v1095 = vunpack.c.l.b16 %v919
    %v1096 = vunpack.c.h.b16 %v919
    %v1097 = vunpack.c.l.b16 %v920
    %v1098 = vunpack.c.h.b16 %v920
    %v1099 = vunpack.c.l.b16 %v921
    %v1100 = vunpack.c.h.b16 %v921
    %v1101 = vunpack.c.l.b16 %v922
    %v1102 = vunpack.c.h.b16 %v922
    %v1103 = vunpack.c.l.b16 %v923
    %v1104 = vunpack.c.h.b16 %v923
    %v1105 = vunpack.c.l.b16 %v924
    %v1106 = vunpack.c.h.b16 %v924
    %v1107 = vunpack.c.l.b16 %v925
    %v1108 = vunpack.c.h.b16 %v925
    %v1109 = vunpack.c.l.b16 %v926
    %v1110 = vunpack.c.h.b16 %v926
    %v1111 = vunpack.c.l.b16 %v927
    %v1112 = vunpack.c.h.b16 %v927
    %v1113 = vunpack.c.l.b16 %v928
    %v1114 = vunpack.c.h.b16 %v928
    %v1115 = vunpack.c.l.b16 %v929
    %v1116 = vunpack.c.h.b16 %v929
    %v1117 = vunpack.c.l.b16 %v930
    %v1118 = vunpack.c.h.b16 %v930
    %v1119 = vunpack.c.l.b16 %v931
    %v1120 = vunpack.c.h.b16 %v931
    %v1121 = vunpack.c.l.b16 %v932
    %v1122 = vunpack.c.h.b16 %v932
    %v1123 = vunpack.c.l.b16 %v933
    %v1124 = vunpack.c.h.b16 %v933
    %v1125 = vunpack.c.l.b16 %v934
    %v1126 = vunpack.c.h.b16 %v934
    %v1127 = vunpack.c.l.b16 %v935
    %v1128 = vunpack.c.h.b16 %v935
    %v1129 = vunpack.c.l.b16 %v936
    %v1130 = vunpack.c.h.b16 %v936
    %v1131 = vunpack.c.l.b16 %v937
    %v1132 = vunpack.c.h.b16 %v937
    %v1133 = vunpack.c.l.b16 %v938
    %v1134 = vunpack.c.h.b16 %v938
    %v1135 = vunpack.c.l.b16 %v939
    %v1136 = vunpack.c.h.b16 %v939
    %v1137 = vunpack.c.l.b16 %v940
    %v1138 = vunpack.c.h.b16 %v940
    %v1139 = vunpack.c.l.b16 %v941
    %v1140 = vunpack.c.h.b16 %v941
    %v1141 = vunpack.c.l.b16 %v942
    %v1142 = vunpack.c.h.b16 %v942
    %v1143 = vunpack.c.l.b16 %v943
    %v1144 = vunpack.c.h.b16 %v943
    %v1145 = vunpack.c.l.b16 %v944
    %v1146 = vunpack.c.h.b16 %v944
    %v1147 = vunpack.c.l.b16 %v945
    %v1148 = vunpack.c.h.b16 %v945
    %v1149 = vunpack.c.l.b16 %v946
    %v1150 = vunpack.c.h.b16 %v946
    %v1151 = vpack.c.b16 %v1025, %v1023
    %v1152 = vpack.c.b16 %v1026, %v1024
    %v1153 = vpack.c.b16 %v1029, %v1027
    %v1154 = vpack.c.b16 %v1030, %v1028
    %v1155 = vpack.c.b16 %v1033, %v1031
    %v1156 = vpack.c.b16 %v1034, %v1032
    %v1157 = vpack.c.b16 %v1037, %v1035
    %v1158 = vpack.c.b16 %v1038, %v1036
    %v1159 = vpack.c.b16 %v1041, %v1039
    %v1160 = vpack.c.b16 %v1042, %v1040
    %v1161 = vpack.c.b16 %v1045, %v1043
    %v1162 = vpack.c.b16 %v1046, %v1044
    %v1163 = vpack.c.b16 %v1049, %v1047
    %v1164 = vpack.c.b16 %v1050, %v1048
    %v1165 = vpack.c.b16 %v1053, %v1051
    %v1166 = vpack.c.b16 %v1054, %v1052
    %v1167 = vpack.c.b16 %v1057, %v1055
    %v1168 = vpack.c.b16 %v1058, %v1056
    %v1169 = vpack.c.b16 %v1061, %v1059
    %v1170 = vpack.c.b16 %v1062, %v1060
    %v1171 = vpack.c.b16 %v1065, %v1063
    %v1172 = vpack.c.b16 %v1066, %v1064
    %v1173 = vpack.c.b16 %v1069, %v1067
    %v1174 = vpack.c.b16 %v1070, %v1068
    %v1175 = vpack.c.b16 %v1073, %v1071
    %v1176 = vpack.c.b16 %v1074, %v1072
    %v1177 = vpack.c.b16 %v1077, %v1075
    %v1178 = vpack.c.b16 %v1078, %v1076
    %v1179 = vpack.c.b16 %v1081, %v1079
    %v1180 = vpack.c.b16 %v1082, %v1080
    %v1181 = vpack.c.b16 %v1085, %v1083
    %v1182 = vpack.c.b16 %v1086, %v1084
    %v1183 = vpack.c.b16 %v1089, %v1087
    %v1184 = vpack.c.b16 %v1090, %v1088
    %v1185 = vpack.c.b16 %v1093, %v1091
    %v1186 = vpack.c.b16 %v1094, %v1092
    %v1187 = vpack.c.b16 %v1097, %v1095
    %v1188 = vpack.c.b16 %v1098, %v1096
    %v1189 = vpack.c.b16 %v1101, %v1099
    %v1190 = vpack.c.b16 %v1102, %v1100
    %v1191 = vpack.c.b16 %v1105, %v1103
    %v1192 = vpack.c.b16 %v1106, %v1104
    %v1193 = vpack.c.b16 %v1109, %v1107
    %v1194 = vpack.c.b16 %v1110, %v1108
    %v1195 = vpack.c.b16 %v1113, %v1111
    %v1196 = vpack.c.b16 %v1114, %v1112
    %v1197 = vpack.c.b16 %v1117, %v1115
    %v1198 = vpack.c.b16 %v1118, %v1116
    %v1199 = vpack.c.b16 %v1121, %v1119
    %v1200 = vpack.c.b16 %v1122, %v1120
    %v1201 = vpack.c.b16 %v1125, %v1123
    %v1202 = vpack.c.b16 %v1126, %v1124
    %v1203 = vpack.c.b16 %v1129, %v1127
    %v1204 = vpack.c.b16 %v1130, %v1128
    %v1205 = vpack.c.b16 %v1133, %v1131
    %v1206 = vpack.c.b16 %v1134, %v1132
    %v1207 = vpack.c.b16 %v1137, %v1135
    %v1208 = vpack.c.b16 %v1138, %v1136
    %v1209 = vpack.c.b16 %v1141, %v1139
    %v1210 = vpack.c.b16 %v1142, %v1140
    %v1211 = vpack.c.b16 %v1145, %v1143
    %v1212 = vpack.c.b16 %v1146, %v1144
    %v1213 = vpack.c.b16 %v1149, %v1147
    %v1214 = vpack.c.b16 %v1150, %v1148
    %1279 = vmatprep.subr.bf16.mxu0 %v1152
    %1280 = vmatpush1.bf16.msra.mxu0 %v1151
    %1281 = vmatprep.subr.bf16.mxu0 %v1154
    %1282 = vmatpush1.bf16.msra.mxu0 %v1153
    %1283 = vmatprep.subr.bf16.mxu0 %v1156
    %1284 = vmatpush1.bf16.msra.mxu0 %v1155
    %1285 = vmatprep.subr.bf16.mxu0 %v1158
    %1286 = vmatpush1.bf16.msra.mxu0 %v1157
    %1287 = vmatprep.subr.bf16.mxu0 %v1160
    %1288 = vmatpush1.bf16.msra.mxu0 %v1159
    %1289 = vmatprep.subr.bf16.mxu0 %v1162
    %1290 = vmatpush1.bf16.msra.mxu0 %v1161
    %1291 = vmatprep.subr.bf16.mxu0 %v1164
    %1292 = vmatpush1.bf16.msra.mxu0 %v1163
    %1293 = vmatprep.subr.bf16.mxu0 %v1166
    %1294 = vmatpush1.bf16.msra.mxu0 %v1165
    %1295 = vmatprep.subr.bf16.mxu0 %v1168
    %1296 = vmatpush1.bf16.msra.mxu0 %v1167
    %1297 = vmatprep.subr.bf16.mxu0 %v1170
    %1298 = vmatpush1.bf16.msra.mxu0 %v1169
    %1299 = vmatprep.subr.bf16.mxu0 %v1172
    %1300 = vmatpush1.bf16.msra.mxu0 %v1171
    %1301 = vmatprep.subr.bf16.mxu0 %v1174
    %1302 = vmatpush1.bf16.msra.mxu0 %v1173
    %1303 = vmatprep.subr.bf16.mxu0 %v1176
    %1304 = vmatpush1.bf16.msra.mxu0 %v1175
    %1305 = vmatprep.subr.bf16.mxu0 %v1178
    %1306 = vmatpush1.bf16.msra.mxu0 %v1177
    %1307 = vmatprep.subr.bf16.mxu0 %v1180
    %1308 = vmatpush1.bf16.msra.mxu0 %v1179
    %1309 = vmatprep.subr.bf16.mxu0 %v1182
    %1310 = vmatpush1.bf16.msra.mxu0 %v1181
    %1311 = vmatprep.mubr.bf16.mxu0 %v880
    %1312 = vmatmul.mubr.bf16.gmra.mrb[0].mxu0 %v879
    %v1313 = vpop.f32.mrb[0].mxu0
    %v1314 = vadd.f32 %v952, %v1313
    %v1315 = vpop.f32.mrb[0].mxu0
    %v1316 = vadd.f32 %v956, %v1315
    %v1317 = vpop.f32.mrb[0].mxu0
    %v1318 = vpop.f32.mrb[0].mxu0
    %1319 = vdwg.mxu0
    %1320 = vmatprep.subr.bf16.mxu0 %v1184
    %1321 = vmatpush1.bf16.msra.mxu0 %v1183
    %1322 = vmatprep.subr.bf16.mxu0 %v1186
    %1323 = vmatpush1.bf16.msra.mxu0 %v1185
    %1324 = vmatprep.subr.bf16.mxu0 %v1188
    %1325 = vmatpush1.bf16.msra.mxu0 %v1187
    %1326 = vmatprep.subr.bf16.mxu0 %v1190
    %1327 = vmatpush1.bf16.msra.mxu0 %v1189
    %1328 = vmatprep.subr.bf16.mxu0 %v1192
    %1329 = vmatpush1.bf16.msra.mxu0 %v1191
    %1330 = vmatprep.subr.bf16.mxu0 %v1194
    %1331 = vmatpush1.bf16.msra.mxu0 %v1193
    %1332 = vmatprep.subr.bf16.mxu0 %v1196
    %1333 = vmatpush1.bf16.msra.mxu0 %v1195
    %1334 = vmatprep.subr.bf16.mxu0 %v1198
    %1335 = vmatpush1.bf16.msra.mxu0 %v1197
    %1336 = vmatprep.subr.bf16.mxu0 %v1200
    %1337 = vmatpush1.bf16.msra.mxu0 %v1199
    %1338 = vmatprep.subr.bf16.mxu0 %v1202
    %1339 = vmatpush1.bf16.msra.mxu0 %v1201
    %1340 = vmatprep.subr.bf16.mxu0 %v1204
    %1341 = vmatpush1.bf16.msra.mxu0 %v1203
    %1342 = vmatprep.subr.bf16.mxu0 %v1206
    %1343 = vmatpush1.bf16.msra.mxu0 %v1205
    %1344 = vmatprep.subr.bf16.mxu0 %v1208
    %1345 = vmatpush1.bf16.msra.mxu0 %v1207
    %1346 = vmatprep.subr.bf16.mxu0 %v1210
    %1347 = vmatpush1.bf16.msra.mxu0 %v1209
    %1348 = vmatprep.subr.bf16.mxu0 %v1212
    %1349 = vmatpush1.bf16.msra.mxu0 %v1211
    %1350 = vmatprep.subr.bf16.mxu0 %v1214
    %1351 = vmatpush1.bf16.msra.mxu0 %v1213
    %1352 = vmatprep.mubr.bf16.mxu0 %v882
    %1353 = vmatmul.mubr.bf16.gmra.mrb[0].mxu0 %v881
    %v1354 = vpop.f32.mrb[0].mxu0
    %v1355 = vadd.f32 %v1314, %v1354
    %v1356 = vpop.f32.mrb[0].mxu0
    %v1357 = vadd.f32 %v1316, %v1356
    %v1358 = vpop.f32.mrb[0].mxu0
    %v1359 = vpop.f32.mrb[0].mxu0
    %1360 = vdwg.mxu0
    %v1361 = vmax.f32 %v1355, 0.0
    %v1362 = vmax.f32 %v1357, 0.0
    %v1363 = vpack.c.bf16 %v1361, %v1361
    %v1364 = vpack.c.bf16 %v1362, %v1362
    %v1365 = vld [vmem:[#allocation8] sm:$0xf]
    %v1366 = vld [vmem:[#allocation8 + $0x4] sm:$0xf]
    %v1367 = vld [vmem:[#allocation8 + $0x8] sm:$0xf]
    %v1368 = vld [vmem:[#allocation8 + $0xc] sm:$0xf]
    %v1369 = vld [vmem:[#allocation8 + $0x10] sm:$0xf]
    %v1370 = vld [vmem:[#allocation8 + $0x14] sm:$0xf]
    %v1371 = vld [vmem:[#allocation8 + $0x18] sm:$0xf]
    %v1372 = vld [vmem:[#allocation8 + $0x1c] sm:$0xf]
    %v1373 = vld [vmem:[#allocation8 + $0x20] sm:$0xf]
    %v1374 = vld [vmem:[#allocation8 + $0x24] sm:$0xf]
    %v1375 = vld [vmem:[#allocation8 + $0x28] sm:$0xf]
    %v1376 = vld [vmem:[#allocation8 + $0x2c] sm:$0xf]
    %v1377 = vld [vmem:[#allocation8 + $0x30] sm:$0xf]
    %v1378 = vld [vmem:[#allocation8 + $0x34] sm:$0xf]
    %v1379 = vld [vmem:[#allocation8 + $0x38] sm:$0xf]
    %v1380 = vld [vmem:[#allocation8 + $0x3c] sm:$0xf]
    %v1381 = vld [vmem:[#allocation8 + $0x40] sm:$0xf]
    %v1382 = vld [vmem:[#allocation8 + $0x44] sm:$0xf]
    %v1383 = vld [vmem:[#allocation8 + $0x48] sm:$0xf]
    %v1384 = vld [vmem:[#allocation8 + $0x4c] sm:$0xf]
    %v1385 = vld [vmem:[#allocation8 + $0x50] sm:$0xf]
    %v1386 = vld [vmem:[#allocation8 + $0x54] sm:$0xf]
    %v1387 = vld [vmem:[#allocation8 + $0x58] sm:$0xf]
    %v1388 = vld [vmem:[#allocation8 + $0x5c] sm:$0xf]
    %v1389 = vld [vmem:[#allocation8 + $0x60] sm:$0xf]
    %v1390 = vld [vmem:[#allocation8 + $0x64] sm:$0xf]
    %v1391 = vld [vmem:[#allocation8 + $0x68] sm:$0xf]
    %v1392 = vld [vmem:[#allocation8 + $0x6c] sm:$0xf]
    %v1393 = vld [vmem:[#allocation8 + $0x70] sm:$0xf]
    %v1394 = vld [vmem:[#allocation8 + $0x74] sm:$0xf]
    %v1395 = vld [vmem:[#allocation8 + $0x78] sm:$0xf]
    %v1396 = vld [vmem:[#allocation8 + $0x7c] sm:$0xf]
    %v1397 = vld [vmem:[%s6] sm:$0x1]
    %v1399 = vlaneseq
    %v1400 = vshrl.u32 %v1399, 7
    %v1401 = vsub.s32 0, %v1400
    %v1402 = vrot.slane %v1397, %v1401
    %v1436 = vunpack.c.l.b16 %v1365
    %v1437 = vunpack.c.l.b16 %v1366
    %v1438 = vunpack.c.l.b16 %v1367
    %v1439 = vunpack.c.l.b16 %v1368
    %v1440 = vunpack.c.l.b16 %v1369
    %v1441 = vunpack.c.l.b16 %v1370
    %v1442 = vunpack.c.l.b16 %v1371
    %v1443 = vunpack.c.l.b16 %v1372
    %v1444 = vunpack.c.l.b16 %v1373
    %v1445 = vunpack.c.l.b16 %v1374
    %v1446 = vunpack.c.l.b16 %v1375
    %v1447 = vunpack.c.l.b16 %v1376
    %v1448 = vunpack.c.l.b16 %v1377
    %v1449 = vunpack.c.l.b16 %v1378
    %v1450 = vunpack.c.l.b16 %v1379
    %v1451 = vunpack.c.l.b16 %v1380
    %v1452 = vunpack.c.l.b16 %v1381
    %v1453 = vunpack.c.l.b16 %v1382
    %v1454 = vunpack.c.l.b16 %v1383
    %v1455 = vunpack.c.l.b16 %v1384
    %v1456 = vunpack.c.l.b16 %v1385
    %v1457 = vunpack.c.l.b16 %v1386
    %v1458 = vunpack.c.l.b16 %v1387
    %v1459 = vunpack.c.l.b16 %v1388
    %v1460 = vunpack.c.l.b16 %v1389
    %v1461 = vunpack.c.l.b16 %v1390
    %v1462 = vunpack.c.l.b16 %v1391
    %v1463 = vunpack.c.l.b16 %v1392
    %v1464 = vunpack.c.l.b16 %v1393
    %v1465 = vunpack.c.l.b16 %v1394
    %v1466 = vunpack.c.l.b16 %v1395
    %v1467 = vunpack.c.l.b16 %v1396
    %v1468 = vpack.c.b16 %v1437, %v1436
    %v1469 = vpack.c.b16 %v1439, %v1438
    %v1470 = vpack.c.b16 %v1441, %v1440
    %v1471 = vpack.c.b16 %v1443, %v1442
    %v1472 = vpack.c.b16 %v1445, %v1444
    %v1473 = vpack.c.b16 %v1447, %v1446
    %v1474 = vpack.c.b16 %v1449, %v1448
    %v1475 = vpack.c.b16 %v1451, %v1450
    %v1476 = vpack.c.b16 %v1453, %v1452
    %v1477 = vpack.c.b16 %v1455, %v1454
    %v1478 = vpack.c.b16 %v1457, %v1456
    %v1479 = vpack.c.b16 %v1459, %v1458
    %v1480 = vpack.c.b16 %v1461, %v1460
    %v1481 = vpack.c.b16 %v1463, %v1462
    %v1482 = vpack.c.b16 %v1465, %v1464
    %v1483 = vpack.c.b16 %v1467, %v1466
    %1500 = vmatprep.subr.bf16.mxu0 0
    %1501 = vmatpush1.bf16.msra.mxu0 %v1468
    %1502 = vmatprep.subr.bf16.mxu0 0
    %1503 = vmatpush1.bf16.msra.mxu0 %v1469
    %1504 = vmatprep.subr.bf16.mxu0 0
    %1505 = vmatpush1.bf16.msra.mxu0 %v1470
    %1506 = vmatprep.subr.bf16.mxu0 0
    %1507 = vmatpush1.bf16.msra.mxu0 %v1471
    %1508 = vmatprep.subr.bf16.mxu0 0
    %1509 = vmatpush1.bf16.msra.mxu0 %v1472
    %1510 = vmatprep.subr.bf16.mxu0 0
    %1511 = vmatpush1.bf16.msra.mxu0 %v1473
    %1512 = vmatprep.subr.bf16.mxu0 0
    %1513 = vmatpush1.bf16.msra.mxu0 %v1474
    %1514 = vmatprep.subr.bf16.mxu0 0
    %1515 = vmatpush1.bf16.msra.mxu0 %v1475
    %1516 = vmatprep.subr.bf16.mxu0 0
    %1517 = vmatpush1.bf16.msra.mxu0 %v1476
    %1518 = vmatprep.subr.bf16.mxu0 0
    %1519 = vmatpush1.bf16.msra.mxu0 %v1477
    %1520 = vmatprep.subr.bf16.mxu0 0
    %1521 = vmatpush1.bf16.msra.mxu0 %v1478
    %1522 = vmatprep.subr.bf16.mxu0 0
    %1523 = vmatpush1.bf16.msra.mxu0 %v1479
    %1524 = vmatprep.subr.bf16.mxu0 0
    %1525 = vmatpush1.bf16.msra.mxu0 %v1480
    %1526 = vmatprep.subr.bf16.mxu0 0
    %1527 = vmatpush1.bf16.msra.mxu0 %v1481
    %1528 = vmatprep.subr.bf16.mxu0 0
    %1529 = vmatpush1.bf16.msra.mxu0 %v1482
    %1530 = vmatprep.subr.bf16.mxu0 0
    %1531 = vmatpush1.bf16.msra.mxu0 %v1483
    %1532 = vmatprep.mubr.bf16.mxu0 %v1364
    %1533 = vmatmul.mubr.bf16.gmra.mrb[0].mxu0 %v1363
    %v1534 = vpop.f32.mrb[0].mxu0
    %v1535 = vadd.f32 %v1402, %v1534
    %v1536 = vpop.f32.mrb[0].mxu0
    %v1537 = vpop.f32.mrb[0].mxu0
    %v1538 = vpop.f32.mrb[0].mxu0
    %1539 = vdwg.mxu0
    %v1540 = vmax.f32 %v1535, 0.0
    %v1541 = vpack.c.bf16 %v1540, %v1540
    %v1542 = vld [vmem:[#allocation10] sm:$0xf]
    %v1543 = vld [vmem:[#allocation10 + $0x4] sm:$0xf]
    %v1544 = vld [vmem:[#allocation10 + $0x8] sm:$0xf]
    %v1545 = vld [vmem:[#allocation10 + $0xc] sm:$0xf]
    %v1546 = vld [vmem:[#allocation10 + $0x10] sm:$0xf]
    %v1547 = vld [vmem:[#allocation10 + $0x14] sm:$0xf]
    %v1548 = vld [vmem:[#allocation10 + $0x18] sm:$0xf]
    %v1549 = vld [vmem:[#allocation10 + $0x1c] sm:$0xf]
    %v1550 = vld [vmem:[#allocation10 + $0x20] sm:$0xf]
    %v1551 = vld [vmem:[#allocation10 + $0x24] sm:$0xf]
    %v1552 = vld [vmem:[#allocation10 + $0x28] sm:$0xf]
    %v1553 = vld [vmem:[#allocation10 + $0x2c] sm:$0xf]
    %v1554 = vld [vmem:[#allocation10 + $0x30] sm:$0xf]
    %v1555 = vld [vmem:[#allocation10 + $0x34] sm:$0xf]
    %v1556 = vld [vmem:[#allocation10 + $0x38] sm:$0xf]
    %v1557 = vld [vmem:[#allocation10 + $0x3c] sm:$0xf]
    %v1558 = vld [vmem:[%s8] sm:$0x1]
    %v1560 = vlaneseq
    %v1561 = vshrl.u32 %v1560, 7
    %v1562 = vsub.s32 0, %v1561
    %v1563 = vrot.slane %v1558, %v1562
    %v1581 = vunpack.c.l.b16 %v1542
    %v1582 = vunpack.c.l.b16 %v1543
    %v1583 = vunpack.c.l.b16 %v1544
    %v1584 = vunpack.c.l.b16 %v1545
    %v1585 = vunpack.c.l.b16 %v1546
    %v1586 = vunpack.c.l.b16 %v1547
    %v1587 = vunpack.c.l.b16 %v1548
    %v1588 = vunpack.c.l.b16 %v1549
    %v1589 = vunpack.c.l.b16 %v1550
    %v1590 = vunpack.c.l.b16 %v1551
    %v1591 = vunpack.c.l.b16 %v1552
    %v1592 = vunpack.c.l.b16 %v1553
    %v1593 = vunpack.c.l.b16 %v1554
    %v1594 = vunpack.c.l.b16 %v1555
    %v1595 = vunpack.c.l.b16 %v1556
    %v1596 = vunpack.c.l.b16 %v1557
    %v1597 = vpack.c.b16 %v1582, %v1581
    %v1598 = vpack.c.b16 %v1584, %v1583
    %v1599 = vpack.c.b16 %v1586, %v1585
    %v1600 = vpack.c.b16 %v1588, %v1587
    %v1601 = vpack.c.b16 %v1590, %v1589
    %v1602 = vpack.c.b16 %v1592, %v1591
    %v1603 = vpack.c.b16 %v1594, %v1593
    %v1604 = vpack.c.b16 %v1596, %v1595
    %1613 = vmatprep.subr.bf16.mxu0 0
    %1614 = vmatpush1.bf16.msra.mxu0 %v1597
    %1615 = vmatprep.subr.bf16.mxu0 0
    %1616 = vmatpush1.bf16.msra.mxu0 %v1598
    %1617 = vmatprep.subr.bf16.mxu0 0
    %1618 = vmatpush1.bf16.msra.mxu0 %v1599
    %1619 = vmatprep.subr.bf16.mxu0 0
    %1620 = vmatpush1.bf16.msra.mxu0 %v1600
    %1621 = vmatprep.subr.bf16.mxu0 0
    %1622 = vmatpush1.bf16.msra.mxu0 %v1601
    %1623 = vmatprep.subr.bf16.mxu0 0
    %1624 = vmatpush1.bf16.msra.mxu0 %v1602
    %1625 = vmatprep.subr.bf16.mxu0 0
    %1626 = vmatpush1.bf16.msra.mxu0 %v1603
    %1627 = vmatprep.subr.bf16.mxu0 0
    %1628 = vmatpush1.bf16.msra.mxu0 %v1604
    %1629 = vmatprep.subr.bf16.mxu0 0
    %1630 = vmatpush1.bf16.msra.mxu0 0
    %1631 = vmatprep.subr.bf16.mxu0 0
    %1632 = vmatpush1.bf16.msra.mxu0 0
    %1633 = vmatprep.subr.bf16.mxu0 0
    %1634 = vmatpush1.bf16.msra.mxu0 0
    %1635 = vmatprep.subr.bf16.mxu0 0
    %1636 = vmatpush1.bf16.msra.mxu0 0
    %1637 = vmatprep.subr.bf16.mxu0 0
    %1638 = vmatpush1.bf16.msra.mxu0 0
    %1639 = vmatprep.subr.bf16.mxu0 0
    %1640 = vmatpush1.bf16.msra.mxu0 0
    %1641 = vmatprep.subr.bf16.mxu0 0
    %1642 = vmatpush1.bf16.msra.mxu0 0
    %1643 = vmatprep.subr.bf16.mxu0 0
    %1644 = vmatpush1.bf16.msra.mxu0 0
    %1645 = vmatprep.mubr.bf16.mxu0 0
    %1646 = vmatmul.mubr.bf16.gmra.mrb[0].mxu0 %v1541
    %v1647 = vpop.f32.mrb[0].mxu0
    %v1648 = vadd.f32 %v1563, %v1647
    %v1649 = vpop.f32.mrb[0].mxu0
    %v1650 = vpop.f32.mrb[0].mxu0
    %v1651 = vpop.f32.mrb[0].mxu0
    %1652 = vdwg.mxu0
    %1653 = vst [vmem:[#allocation11] sm:$0xff] %v1648
    // Predicated region
    $region58: #{tpu_custom_call.1} parent=1 // pred_check
      _
    $region59: #{tpu_custom_call.1} parent=1 // pred_check_branch
      %1655 = sbr.rel (0) target = $region61
    $region60: #{tpu_custom_call.1} parent=1 // pred_region
      %s1657 = ssub.s32 128, 128
      %1658 = vsyncadd [#allocation4], %s1657
      %s1660 = sshll.u32 [#allocation11], 4
      %s1661 = int_to_ptr.vmem [resolvable:$true] %s1660
      %1663 = dma.vmem_to_hbm [thread:$0]  %s1661, 128, %s9, [#allocation4]
    $region61: #{tpu_custom_call.1} parent=1 // pred_fallthru
      _
    // Predicated region
    $region62: #{tpu_custom_call.1} parent=1 // pred_check
      _
    $region63: #{tpu_custom_call.1} parent=1 // pred_check_branch
      %1665 = sbr.rel (0) target = $region65
    $region64: #{tpu_custom_call.1} parent=1 // pred_region
      %1666 = dma.done [#allocation4], 128
    $region65: #{tpu_custom_call.1} parent=1 // pred_fallthru
      _
    %1667 = vsyncpa [#allocation3], 1
    %1668 = vsyncpa [#allocation6], 1
    %1669 = vsyncpa [#allocation9], 1
    %1670 = vsyncpa [#allocation4], 1

</llo_original>
